<compile_context>
chip_gen: v7x
topology: tpu7x:2x2x1
jax: 0.10.0
libtpu: 0.0.40
codegen_flags: <defaults>
</compile_context>

<pallas_src>
import jax
import jax.numpy as jnp
from jax.experimental import pallas as pl
from jax.experimental.pallas import tpu as pltpu


def _fft_loss_kernel(crh_ref, cih_ref, crw_ref, sw1_ref, sw2_ref,
                     x_ref, y_ref, out_ref, acc_ref):
    step = pl.program_id(0)

    @pl.when(step == 0)
    def _():
        acc_ref[...] = jnp.zeros_like(acc_ref)

    crh = crh_ref[...]          # (Hh, H) bf16, Hermitian row weights folded in
    cih = cih_ref[...]          # (Hh, H) bf16
    crw = crw_ref[...]          # (W, W)  bf16: cos
    sw1 = sw1_ref[...]          # (W, W)  bf16: cos + sin
    sw2 = sw2_ref[...]          # (W, W)  bf16: sin - cos

    nb = x_ref.shape[0]
    mag_sum = None
    for n in range(nb):         # static unroll; nb is a small Python int
        # Real difference of one image, fed to the MXU in bf16.
        d = (x_ref[n] - y_ref[n]).astype(jnp.bfloat16)             # (H, W)

        # Row (H-axis) rfft: T + iU = F_Hh @ d, contraction over K = H.
        t = jnp.dot(crh, d, preferred_element_type=jnp.float32)    # (Hh, W)
        u = jnp.dot(cih, d, preferred_element_type=jnp.float32)    # (Hh, W)

        # Column (W-axis) full DFT via the Gauss 3-mult complex product:
        #   Re = m1 - m2, Im = m1 + m3
        m1 = jnp.dot((t + u).astype(jnp.bfloat16), crw,
                     preferred_element_type=jnp.float32)
        m2 = jnp.dot(u.astype(jnp.bfloat16), sw1,
                     preferred_element_type=jnp.float32)
        m3 = jnp.dot(t.astype(jnp.bfloat16), sw2,
                     preferred_element_type=jnp.float32)
        re = m1 - m2
        im = m1 + m3

        mag = jnp.sqrt(re * re + im * im)                          # (Hh, W)
        mag_sum = mag if mag_sum is None else mag_sum + mag

    # Elementwise accumulation (VPU); the cross-lane reduction happens once
    # in the epilogue instead of every grid step.
    acc_ref[...] += mag_sum

    @pl.when(step == pl.num_programs(0) - 1)
    def _():
        out_ref[...] = jnp.zeros_like(out_ref) + jnp.sum(acc_ref[...])


def _row_rdft_matrices(h):
    """(Hh, H) cos/sin DFT rows with the Hermitian fold weights baked in."""
    hh = h // 2 + 1
    k = jnp.arange(hh, dtype=jnp.int32)[:, None]
    j = jnp.arange(h, dtype=jnp.int32)[None, :]
    m = (k * j) % h                                    # exact integer phase
    ang = (-2.0 * jnp.pi / h) * m.astype(jnp.float32)
    # weight 1 for DC and (even H) Nyquist rows, 2 for interior rows
    wt = jnp.where((k == 0) | (2 * k == h), 1.0, 2.0).astype(jnp.float32)
    return jnp.cos(ang) * wt, jnp.sin(ang) * wt        # f32


def _col_dft_matrices(w):
    """(W, W) cos/sin DFT matrices."""
    k = jnp.arange(w, dtype=jnp.int32)
    m = (k[:, None] * k[None, :]) % w
    ang = (-2.0 * jnp.pi / w) * m.astype(jnp.float32)
    return jnp.cos(ang), jnp.sin(ang)                  # f32


def _images_per_block(n, h):
    # A handful of images per grid step amortizes the ~0.35us/step overhead;
    # cap the in-kernel unroll at 8 and target ~256 input rows per block.
    return max(1, min(n, 8, 256 // max(h, 1)))


def fft_loss(x, y):
    """Pallas equivalent of FFTLoss().forward(x, y) for real NCHW inputs."""
    B, C, H, W = x.shape
    N = B * C
    Hh = H // 2 + 1

    nb = _images_per_block(N, H)
    steps = pl.cdiv(N, nb)
    n_pad = steps * nb

    xr = x.reshape(N, H, W)
    yr = y.reshape(N, H, W)
    if n_pad != N:
        # Zero-padded images contribute |fft2(0)| == 0 to the sum.
        pad = ((0, n_pad - N), (0, 0), (0, 0))
        xr = jnp.pad(xr, pad)
        yr = jnp.pad(yr, pad)

    crh_f, cih_f = _row_rdft_matrices(H)
    crw_f, ciw_f = _col_dft_matrices(W)
    crh = crh_f.astype(jnp.bfloat16)
    cih = cih_f.astype(jnp.bfloat16)
    crw = crw_f.astype(jnp.bfloat16)
    sw1 = (crw_f + ciw_f).astype(jnp.bfloat16)   # cos + sin
    sw2 = (ciw_f - crw_f).astype(jnp.bfloat16)   # sin - cos

    total = float(B * C * H * W)
    itemsize = jnp.dtype(x.dtype).itemsize
    flops = int(n_pad * (4 * Hh * H * W + 6 * Hh * W * W + 10 * Hh * W))
    bytes_accessed = int(2 * n_pad * H * W * itemsize
                         + (2 * Hh * H + 3 * W * W) * 2 + 4)
    cost = pl.CostEstimate(flops=flops,
                           transcendentals=int(n_pad * Hh * W),
                           bytes_accessed=bytes_accessed)

    out = pl.pallas_call(
        _fft_loss_kernel,
        out_shape=jax.ShapeDtypeStruct((1, 1), jnp.float32),
        grid_spec=pltpu.PrefetchScalarGridSpec(
            num_scalar_prefetch=0,
            grid=(steps,),
            in_specs=[
                pl.BlockSpec((Hh, H), lambda i: (0, 0)),        # weighted cos rows
                pl.BlockSpec((Hh, H), lambda i: (0, 0)),        # weighted sin rows
                pl.BlockSpec((W, W), lambda i: (0, 0)),         # cos cols
                pl.BlockSpec((W, W), lambda i: (0, 0)),         # cos + sin cols
                pl.BlockSpec((W, W), lambda i: (0, 0)),         # sin - cos cols
                pl.BlockSpec((nb, H, W), lambda i: (i, 0, 0)),  # x block
                pl.BlockSpec((nb, H, W), lambda i: (i, 0, 0)),  # y block
            ],
            out_specs=pl.BlockSpec((1, 1), lambda i: (0, 0)),
            scratch_shapes=[pltpu.VMEM((Hh, W), jnp.float32)],
        ),
        compiler_params=pltpu.CompilerParams(
            dimension_semantics=("arbitrary",),
            vmem_limit_bytes=48 * 1024 * 1024),
        cost_estimate=cost,
    )(crh, cih, crw, sw1, sw2, xr, yr)

    return out[0, 0] * (1.0 / total)


if __name__ == "__main__":
    key = jax.random.PRNGKey(0)
    k1, k2 = jax.random.split(key)
    B, C, H, W = 2, 4, 16, 16
    x = jax.random.normal(k1, (B, C, H, W), dtype=jnp.float32)
    y = jax.random.normal(k2, (B, C, H, W), dtype=jnp.float32)

    loss = jax.block_until_ready(fft_loss(x, y))

    # Pure-JAX reference (same semantics as the PyTorch module).
    ref = jnp.mean(jnp.abs(jnp.fft.fft2(x) - jnp.fft.fft2(y)))
    ref = jax.block_until_ready(ref)

    # bf16 MXU feed (per the perf review); observed loss-level error is well
    # below 0.5% relative.
    assert jnp.allclose(loss, ref, rtol=5e-3, atol=5e-3), (loss, ref)

    print("KERNEL_OK")
</pallas_src>

<mosaic_0001>
module attributes {stable_mosaic.version = 11 : i64} {
  func.func @_fft_loss_kernel(%arg0: i32, %arg1: memref<9x16xbf16, #tpu.memory_space<vmem>>, %arg2: memref<9x16xbf16, #tpu.memory_space<vmem>>, %arg3: memref<16x16xbf16, #tpu.memory_space<vmem>>, %arg4: memref<16x16xbf16, #tpu.memory_space<vmem>>, %arg5: memref<16x16xbf16, #tpu.memory_space<vmem>>, %arg6: memref<8x16x16xf32, #tpu.memory_space<vmem>>, %arg7: memref<8x16x16xf32, #tpu.memory_space<vmem>>, %arg8: memref<1x1xf32, #tpu.memory_space<vmem>>, %arg9: memref<9x16xf32, #tpu.memory_space<vmem>>) attributes {dimension_semantics = [#tpu.dimension_semantics<arbitrary>], iteration_bounds = array<i64: 1>, scalar_prefetch = 0 : i64, scratch_operands = 1 : i64, tpu.core_type = #tpu.core_type<tc>, window_params = [{pipeline_mode = #tpu.pipeline_mode<synchronous>, transform_indices = @transform_0, window_bounds = array<i64: 9, 16>}, {pipeline_mode = #tpu.pipeline_mode<synchronous>, transform_indices = @transform_1, window_bounds = array<i64: 9, 16>}, {pipeline_mode = #tpu.pipeline_mode<synchronous>, transform_indices = @transform_2, window_bounds = array<i64: 16, 16>}, {pipeline_mode = #tpu.pipeline_mode<synchronous>, transform_indices = @transform_3, window_bounds = array<i64: 16, 16>}, {pipeline_mode = #tpu.pipeline_mode<synchronous>, transform_indices = @transform_4, window_bounds = array<i64: 16, 16>}, {transform_indices = @transform_5, window_bounds = array<i64: 8, 16, 16>}, {transform_indices = @transform_6, window_bounds = array<i64: 8, 16, 16>}, {pipeline_mode = #tpu.pipeline_mode<synchronous>, transform_indices = @transform_7, window_bounds = array<i64: 1, 1>}]} {
    %c0_i32 = arith.constant 0 : i32
    %0 = arith.cmpi eq, %arg0, %c0_i32 : i32
    %1 = arith.extui %0 : i1 to i32
    %c0_i32_0 = arith.constant 0 : i32
    %2 = arith.cmpi ne, %1, %c0_i32_0 : i32
    scf.if %2 {
      %cst_96 = arith.constant 0.000000e+00 : f32
      %189 = vector.broadcast %cst_96 : f32 to vector<9x16xf32>
      %c0_97 = arith.constant 0 : index
      %c0_98 = arith.constant 0 : index
      %190 = vector.load %arg9[%c0_97, %c0_98] : memref<9x16xf32, #tpu.memory_space<vmem>>, vector<9x16xf32>
      tpu.vector_store %arg9[%c0_97, %c0_98], %189 {strides = array<i32>} : memref<9x16xf32, #tpu.memory_space<vmem>>, vector<9x16xf32>,
    } else {
    }
    %c0 = arith.constant 0 : index
    %c0_1 = arith.constant 0 : index
    %3 = vector.load %arg1[%c0, %c0_1] : memref<9x16xbf16, #tpu.memory_space<vmem>>, vector<9x16xbf16>
    %c0_2 = arith.constant 0 : index
    %c0_3 = arith.constant 0 : index
    %4 = vector.load %arg2[%c0_2, %c0_3] : memref<9x16xbf16, #tpu.memory_space<vmem>>, vector<9x16xbf16>
    %c0_4 = arith.constant 0 : index
    %c0_5 = arith.constant 0 : index
    %5 = vector.load %arg3[%c0_4, %c0_5] : memref<16x16xbf16, #tpu.memory_space<vmem>>, vector<16x16xbf16>
    %c0_6 = arith.constant 0 : index
    %c0_7 = arith.constant 0 : index
    %6 = vector.load %arg4[%c0_6, %c0_7] : memref<16x16xbf16, #tpu.memory_space<vmem>>, vector<16x16xbf16>
    %c0_8 = arith.constant 0 : index
    %c0_9 = arith.constant 0 : index
    %7 = vector.load %arg5[%c0_8, %c0_9] : memref<16x16xbf16, #tpu.memory_space<vmem>>, vector<16x16xbf16>
    %c0_10 = arith.constant 0 : index
    %c0_11 = arith.constant 0 : index
    %c0_12 = arith.constant 0 : index
    %8 = vector.load %arg6[%c0_10, %c0_11, %c0_12] : memref<8x16x16xf32, #tpu.memory_space<vmem>>, vector<1x16x16xf32>
    %9 = vector.shape_cast %8 : vector<1x16x16xf32> to vector<16x16xf32>
    %c0_13 = arith.constant 0 : index
    %c0_14 = arith.constant 0 : index
    %c0_15 = arith.constant 0 : index
    %10 = vector.load %arg7[%c0_13, %c0_14, %c0_15] : memref<8x16x16xf32, #tpu.memory_space<vmem>>, vector<1x16x16xf32>
    %11 = vector.shape_cast %10 : vector<1x16x16xf32> to vector<16x16xf32>
    %12 = arith.subf %9, %11 : vector<16x16xf32>
    %13 = arith.truncf %12 : vector<16x16xf32> to vector<16x16xbf16>
    %cst = arith.constant dense<0.000000e+00> : vector<9x16xf32>
    %14 = tpu.matmul %3, %13, %cst {dimension_numbers = #tpu.dot_dimension_numbers<[1], [0], [0], [1], [0, 0, 1, 1], [], []>} : vector<9x16xbf16>, vector<16x16xbf16>, vector<9x16xf32> -> vector<9x16xf32>
    %cst_16 = arith.constant dense<0.000000e+00> : vector<9x16xf32>
    %15 = tpu.matmul %4, %13, %cst_16 {dimension_numbers = #tpu.dot_dimension_numbers<[1], [0], [0], [1], [0, 0, 1, 1], [], []>} : vector<9x16xbf16>, vector<16x16xbf16>, vector<9x16xf32> -> vector<9x16xf32>
    %16 = arith.addf %14, %15 : vector<9x16xf32>
    %17 = arith.truncf %16 : vector<9x16xf32> to vector<9x16xbf16>
    %cst_17 = arith.constant dense<0.000000e+00> : vector<9x16xf32>
    %18 = tpu.matmul %17, %5, %cst_17 {dimension_numbers = #tpu.dot_dimension_numbers<[1], [0], [0], [1], [0, 0, 1, 1], [], []>} : vector<9x16xbf16>, vector<16x16xbf16>, vector<9x16xf32> -> vector<9x16xf32>
    %19 = arith.truncf %15 : vector<9x16xf32> to vector<9x16xbf16>
    %cst_18 = arith.constant dense<0.000000e+00> : vector<9x16xf32>
    %20 = tpu.matmul %19, %6, %cst_18 {dimension_numbers = #tpu.dot_dimension_numbers<[1], [0], [0], [1], [0, 0, 1, 1], [], []>} : vector<9x16xbf16>, vector<16x16xbf16>, vector<9x16xf32> -> vector<9x16xf32>
    %21 = arith.truncf %14 : vector<9x16xf32> to vector<9x16xbf16>
    %cst_19 = arith.constant dense<0.000000e+00> : vector<9x16xf32>
    %22 = tpu.matmul %21, %7, %cst_19 {dimension_numbers = #tpu.dot_dimension_numbers<[1], [0], [0], [1], [0, 0, 1, 1], [], []>} : vector<9x16xbf16>, vector<16x16xbf16>, vector<9x16xf32> -> vector<9x16xf32>
    %23 = arith.subf %18, %20 : vector<9x16xf32>
    %24 = arith.addf %18, %22 : vector<9x16xf32>
    %25 = arith.mulf %23, %23 : vector<9x16xf32>
    %26 = arith.mulf %24, %24 : vector<9x16xf32>
    %27 = arith.addf %25, %26 : vector<9x16xf32>
    %28 = math.sqrt %27 : vector<9x16xf32>
    %c1 = arith.constant 1 : index
    %c0_20 = arith.constant 0 : index
    %c0_21 = arith.constant 0 : index
    %29 = vector.load %arg6[%c1, %c0_20, %c0_21] : memref<8x16x16xf32, #tpu.memory_space<vmem>>, vector<1x16x16xf32>
    %30 = vector.shape_cast %29 : vector<1x16x16xf32> to vector<16x16xf32>
    %c1_22 = arith.constant 1 : index
    %c0_23 = arith.constant 0 : index
    %c0_24 = arith.constant 0 : index
    %31 = vector.load %arg7[%c1_22, %c0_23, %c0_24] : memref<8x16x16xf32, #tpu.memory_space<vmem>>, vector<1x16x16xf32>
    %32 = vector.shape_cast %31 : vector<1x16x16xf32> to vector<16x16xf32>
    %33 = arith.subf %30, %32 : vector<16x16xf32>
    %34 = arith.truncf %33 : vector<16x16xf32> to vector<16x16xbf16>
    %cst_25 = arith.constant dense<0.000000e+00> : vector<9x16xf32>
    %35 = tpu.matmul %3, %34, %cst_25 {dimension_numbers = #tpu.dot_dimension_numbers<[1], [0], [0], [1], [0, 0, 1, 1], [], []>} : vector<9x16xbf16>, vector<16x16xbf16>, vector<9x16xf32> -> vector<9x16xf32>
    %cst_26 = arith.constant dense<0.000000e+00> : vector<9x16xf32>
    %36 = tpu.matmul %4, %34, %cst_26 {dimension_numbers = #tpu.dot_dimension_numbers<[1], [0], [0], [1], [0, 0, 1, 1], [], []>} : vector<9x16xbf16>, vector<16x16xbf16>, vector<9x16xf32> -> vector<9x16xf32>
    %37 = arith.addf %35, %36 : vector<9x16xf32>
    %38 = arith.truncf %37 : vector<9x16xf32> to vector<9x16xbf16>
    %cst_27 = arith.constant dense<0.000000e+00> : vector<9x16xf32>
    %39 = tpu.matmul %38, %5, %cst_27 {dimension_numbers = #tpu.dot_dimension_numbers<[1], [0], [0], [1], [0, 0, 1, 1], [], []>} : vector<9x16xbf16>, vector<16x16xbf16>, vector<9x16xf32> -> vector<9x16xf32>
    %40 = arith.truncf %36 : vector<9x16xf32> to vector<9x16xbf16>
    %cst_28 = arith.constant dense<0.000000e+00> : vector<9x16xf32>
    %41 = tpu.matmul %40, %6, %cst_28 {dimension_numbers = #tpu.dot_dimension_numbers<[1], [0], [0], [1], [0, 0, 1, 1], [], []>} : vector<9x16xbf16>, vector<16x16xbf16>, vector<9x16xf32> -> vector<9x16xf32>
    %42 = arith.truncf %35 : vector<9x16xf32> to vector<9x16xbf16>
    %cst_29 = arith.constant dense<0.000000e+00> : vector<9x16xf32>
    %43 = tpu.matmul %42, %7, %cst_29 {dimension_numbers = #tpu.dot_dimension_numbers<[1], [0], [0], [1], [0, 0, 1, 1], [], []>} : vector<9x16xbf16>, vector<16x16xbf16>, vector<9x16xf32> -> vector<9x16xf32>
    %44 = arith.subf %39, %41 : vector<9x16xf32>
    %45 = arith.addf %39, %43 : vector<9x16xf32>
    %46 = arith.mulf %44, %44 : vector<9x16xf32>
    %47 = arith.mulf %45, %45 : vector<9x16xf32>
    %48 = arith.addf %46, %47 : vector<9x16xf32>
    %49 = math.sqrt %48 : vector<9x16xf32>
    %50 = arith.addf %28, %49 : vector<9x16xf32>
    %c2 = arith.constant 2 : index
    %c0_30 = arith.constant 0 : index
    %c0_31 = arith.constant 0 : index
    %51 = vector.load %arg6[%c2, %c0_30, %c0_31] : memref<8x16x16xf32, #tpu.memory_space<vmem>>, vector<1x16x16xf32>
    %52 = vector.shape_cast %51 : vector<1x16x16xf32> to vector<16x16xf32>
    %c2_32 = arith.constant 2 : index
    %c0_33 = arith.constant 0 : index
    %c0_34 = arith.constant 0 : index
    %53 = vector.load %arg7[%c2_32, %c0_33, %c0_34] : memref<8x16x16xf32, #tpu.memory_space<vmem>>, vector<1x16x16xf32>
    %54 = vector.shape_cast %53 : vector<1x16x16xf32> to vector<16x16xf32>
    %55 = arith.subf %52, %54 : vector<16x16xf32>
    %56 = arith.truncf %55 : vector<16x16xf32> to vector<16x16xbf16>
    %cst_35 = arith.constant dense<0.000000e+00> : vector<9x16xf32>
    %57 = tpu.matmul %3, %56, %cst_35 {dimension_numbers = #tpu.dot_dimension_numbers<[1], [0], [0], [1], [0, 0, 1, 1], [], []>} : vector<9x16xbf16>, vector<16x16xbf16>, vector<9x16xf32> -> vector<9x16xf32>
    %cst_36 = arith.constant dense<0.000000e+00> : vector<9x16xf32>
    %58 = tpu.matmul %4, %56, %cst_36 {dimension_numbers = #tpu.dot_dimension_numbers<[1], [0], [0], [1], [0, 0, 1, 1], [], []>} : vector<9x16xbf16>, vector<16x16xbf16>, vector<9x16xf32> -> vector<9x16xf32>
    %59 = arith.addf %57, %58 : vector<9x16xf32>
    %60 = arith.truncf %59 : vector<9x16xf32> to vector<9x16xbf16>
    %cst_37 = arith.constant dense<0.000000e+00> : vector<9x16xf32>
    %61 = tpu.matmul %60, %5, %cst_37 {dimension_numbers = #tpu.dot_dimension_numbers<[1], [0], [0], [1], [0, 0, 1, 1], [], []>} : vector<9x16xbf16>, vector<16x16xbf16>, vector<9x16xf32> -> vector<9x16xf32>
    %62 = arith.truncf %58 : vector<9x16xf32> to vector<9x16xbf16>
    %cst_38 = arith.constant dense<0.000000e+00> : vector<9x16xf32>
    %63 = tpu.matmul %62, %6, %cst_38 {dimension_numbers = #tpu.dot_dimension_numbers<[1], [0], [0], [1], [0, 0, 1, 1], [], []>} : vector<9x16xbf16>, vector<16x16xbf16>, vector<9x16xf32> -> vector<9x16xf32>
    %64 = arith.truncf %57 : vector<9x16xf32> to vector<9x16xbf16>
    %cst_39 = arith.constant dense<0.000000e+00> : vector<9x16xf32>
    %65 = tpu.matmul %64, %7, %cst_39 {dimension_numbers = #tpu.dot_dimension_numbers<[1], [0], [0], [1], [0, 0, 1, 1], [], []>} : vector<9x16xbf16>, vector<16x16xbf16>, vector<9x16xf32> -> vector<9x16xf32>
    %66 = arith.subf %61, %63 : vector<9x16xf32>
    %67 = arith.addf %61, %65 : vector<9x16xf32>
    %68 = arith.mulf %66, %66 : vector<9x16xf32>
    %69 = arith.mulf %67, %67 : vector<9x16xf32>
    %70 = arith.addf %68, %69 : vector<9x16xf32>
    %71 = math.sqrt %70 : vector<9x16xf32>
    %72 = arith.addf %50, %71 : vector<9x16xf32>
    %c3 = arith.constant 3 : index
    %c0_40 = arith.constant 0 : index
    %c0_41 = arith.constant 0 : index
    %73 = vector.load %arg6[%c3, %c0_40, %c0_41] : memref<8x16x16xf32, #tpu.memory_space<vmem>>, vector<1x16x16xf32>
    %74 = vector.shape_cast %73 : vector<1x16x16xf32> to vector<16x16xf32>
    %c3_42 = arith.constant 3 : index
    %c0_43 = arith.constant 0 : index
    %c0_44 = arith.constant 0 : index
    %75 = vector.load %arg7[%c3_42, %c0_43, %c0_44] : memref<8x16x16xf32, #tpu.memory_space<vmem>>, vector<1x16x16xf32>
    %76 = vector.shape_cast %75 : vector<1x16x16xf32> to vector<16x16xf32>
    %77 = arith.subf %74, %76 : vector<16x16xf32>
    %78 = arith.truncf %77 : vector<16x16xf32> to vector<16x16xbf16>
    %cst_45 = arith.constant dense<0.000000e+00> : vector<9x16xf32>
    %79 = tpu.matmul %3, %78, %cst_45 {dimension_numbers = #tpu.dot_dimension_numbers<[1], [0], [0], [1], [0, 0, 1, 1], [], []>} : vector<9x16xbf16>, vector<16x16xbf16>, vector<9x16xf32> -> vector<9x16xf32>
    %cst_46 = arith.constant dense<0.000000e+00> : vector<9x16xf32>
    %80 = tpu.matmul %4, %78, %cst_46 {dimension_numbers = #tpu.dot_dimension_numbers<[1], [0], [0], [1], [0, 0, 1, 1], [], []>} : vector<9x16xbf16>, vector<16x16xbf16>, vector<9x16xf32> -> vector<9x16xf32>
    %81 = arith.addf %79, %80 : vector<9x16xf32>
    %82 = arith.truncf %81 : vector<9x16xf32> to vector<9x16xbf16>
    %cst_47 = arith.constant dense<0.000000e+00> : vector<9x16xf32>
    %83 = tpu.matmul %82, %5, %cst_47 {dimension_numbers = #tpu.dot_dimension_numbers<[1], [0], [0], [1], [0, 0, 1, 1], [], []>} : vector<9x16xbf16>, vector<16x16xbf16>, vector<9x16xf32> -> vector<9x16xf32>
    %84 = arith.truncf %80 : vector<9x16xf32> to vector<9x16xbf16>
    %cst_48 = arith.constant dense<0.000000e+00> : vector<9x16xf32>
    %85 = tpu.matmul %84, %6, %cst_48 {dimension_numbers = #tpu.dot_dimension_numbers<[1], [0], [0], [1], [0, 0, 1, 1], [], []>} : vector<9x16xbf16>, vector<16x16xbf16>, vector<9x16xf32> -> vector<9x16xf32>
    %86 = arith.truncf %79 : vector<9x16xf32> to vector<9x16xbf16>
    %cst_49 = arith.constant dense<0.000000e+00> : vector<9x16xf32>
    %87 = tpu.matmul %86, %7, %cst_49 {dimension_numbers = #tpu.dot_dimension_numbers<[1], [0], [0], [1], [0, 0, 1, 1], [], []>} : vector<9x16xbf16>, vector<16x16xbf16>, vector<9x16xf32> -> vector<9x16xf32>
    %88 = arith.subf %83, %85 : vector<9x16xf32>
    %89 = arith.addf %83, %87 : vector<9x16xf32>
    %90 = arith.mulf %88, %88 : vector<9x16xf32>
    %91 = arith.mulf %89, %89 : vector<9x16xf32>
    %92 = arith.addf %90, %91 : vector<9x16xf32>
    %93 = math.sqrt %92 : vector<9x16xf32>
    %94 = arith.addf %72, %93 : vector<9x16xf32>
    %c4 = arith.constant 4 : index
    %c0_50 = arith.constant 0 : index
    %c0_51 = arith.constant 0 : index
    %95 = vector.load %arg6[%c4, %c0_50, %c0_51] : memref<8x16x16xf32, #tpu.memory_space<vmem>>, vector<1x16x16xf32>
    %96 = vector.shape_cast %95 : vector<1x16x16xf32> to vector<16x16xf32>
    %c4_52 = arith.constant 4 : index
    %c0_53 = arith.constant 0 : index
    %c0_54 = arith.constant 0 : index
    %97 = vector.load %arg7[%c4_52, %c0_53, %c0_54] : memref<8x16x16xf32, #tpu.memory_space<vmem>>, vector<1x16x16xf32>
    %98 = vector.shape_cast %97 : vector<1x16x16xf32> to vector<16x16xf32>
    %99 = arith.subf %96, %98 : vector<16x16xf32>
    %100 = arith.truncf %99 : vector<16x16xf32> to vector<16x16xbf16>
    %cst_55 = arith.constant dense<0.000000e+00> : vector<9x16xf32>
    %101 = tpu.matmul %3, %100, %cst_55 {dimension_numbers = #tpu.dot_dimension_numbers<[1], [0], [0], [1], [0, 0, 1, 1], [], []>} : vector<9x16xbf16>, vector<16x16xbf16>, vector<9x16xf32> -> vector<9x16xf32>
    %cst_56 = arith.constant dense<0.000000e+00> : vector<9x16xf32>
    %102 = tpu.matmul %4, %100, %cst_56 {dimension_numbers = #tpu.dot_dimension_numbers<[1], [0], [0], [1], [0, 0, 1, 1], [], []>} : vector<9x16xbf16>, vector<16x16xbf16>, vector<9x16xf32> -> vector<9x16xf32>
    %103 = arith.addf %101, %102 : vector<9x16xf32>
    %104 = arith.truncf %103 : vector<9x16xf32> to vector<9x16xbf16>
    %cst_57 = arith.constant dense<0.000000e+00> : vector<9x16xf32>
    %105 = tpu.matmul %104, %5, %cst_57 {dimension_numbers = #tpu.dot_dimension_numbers<[1], [0], [0], [1], [0, 0, 1, 1], [], []>} : vector<9x16xbf16>, vector<16x16xbf16>, vector<9x16xf32> -> vector<9x16xf32>
    %106 = arith.truncf %102 : vector<9x16xf32> to vector<9x16xbf16>
    %cst_58 = arith.constant dense<0.000000e+00> : vector<9x16xf32>
    %107 = tpu.matmul %106, %6, %cst_58 {dimension_numbers = #tpu.dot_dimension_numbers<[1], [0], [0], [1], [0, 0, 1, 1], [], []>} : vector<9x16xbf16>, vector<16x16xbf16>, vector<9x16xf32> -> vector<9x16xf32>
    %108 = arith.truncf %101 : vector<9x16xf32> to vector<9x16xbf16>
    %cst_59 = arith.constant dense<0.000000e+00> : vector<9x16xf32>
    %109 = tpu.matmul %108, %7, %cst_59 {dimension_numbers = #tpu.dot_dimension_numbers<[1], [0], [0], [1], [0, 0, 1, 1], [], []>} : vector<9x16xbf16>, vector<16x16xbf16>, vector<9x16xf32> -> vector<9x16xf32>
    %110 = arith.subf %105, %107 : vector<9x16xf32>
    %111 = arith.addf %105, %109 : vector<9x16xf32>
    %112 = arith.mulf %110, %110 : vector<9x16xf32>
    %113 = arith.mulf %111, %111 : vector<9x16xf32>
    %114 = arith.addf %112, %113 : vector<9x16xf32>
    %115 = math.sqrt %114 : vector<9x16xf32>
    %116 = arith.addf %94, %115 : vector<9x16xf32>
    %c5 = arith.constant 5 : index
    %c0_60 = arith.constant 0 : index
    %c0_61 = arith.constant 0 : index
    %117 = vector.load %arg6[%c5, %c0_60, %c0_61] : memref<8x16x16xf32, #tpu.memory_space<vmem>>, vector<1x16x16xf32>
    %118 = vector.shape_cast %117 : vector<1x16x16xf32> to vector<16x16xf32>
    %c5_62 = arith.constant 5 : index
    %c0_63 = arith.constant 0 : index
    %c0_64 = arith.constant 0 : index
    %119 = vector.load %arg7[%c5_62, %c0_63, %c0_64] : memref<8x16x16xf32, #tpu.memory_space<vmem>>, vector<1x16x16xf32>
    %120 = vector.shape_cast %119 : vector<1x16x16xf32> to vector<16x16xf32>
    %121 = arith.subf %118, %120 : vector<16x16xf32>
    %122 = arith.truncf %121 : vector<16x16xf32> to vector<16x16xbf16>
    %cst_65 = arith.constant dense<0.000000e+00> : vector<9x16xf32>
    %123 = tpu.matmul %3, %122, %cst_65 {dimension_numbers = #tpu.dot_dimension_numbers<[1], [0], [0], [1], [0, 0, 1, 1], [], []>} : vector<9x16xbf16>, vector<16x16xbf16>, vector<9x16xf32> -> vector<9x16xf32>
    %cst_66 = arith.constant dense<0.000000e+00> : vector<9x16xf32>
    %124 = tpu.matmul %4, %122, %cst_66 {dimension_numbers = #tpu.dot_dimension_numbers<[1], [0], [0], [1], [0, 0, 1, 1], [], []>} : vector<9x16xbf16>, vector<16x16xbf16>, vector<9x16xf32> -> vector<9x16xf32>
    %125 = arith.addf %123, %124 : vector<9x16xf32>
    %126 = arith.truncf %125 : vector<9x16xf32> to vector<9x16xbf16>
    %cst_67 = arith.constant dense<0.000000e+00> : vector<9x16xf32>
    %127 = tpu.matmul %126, %5, %cst_67 {dimension_numbers = #tpu.dot_dimension_numbers<[1], [0], [0], [1], [0, 0, 1, 1], [], []>} : vector<9x16xbf16>, vector<16x16xbf16>, vector<9x16xf32> -> vector<9x16xf32>
    %128 = arith.truncf %124 : vector<9x16xf32> to vector<9x16xbf16>
    %cst_68 = arith.constant dense<0.000000e+00> : vector<9x16xf32>
    %129 = tpu.matmul %128, %6, %cst_68 {dimension_numbers = #tpu.dot_dimension_numbers<[1], [0], [0], [1], [0, 0, 1, 1], [], []>} : vector<9x16xbf16>, vector<16x16xbf16>, vector<9x16xf32> -> vector<9x16xf32>
    %130 = arith.truncf %123 : vector<9x16xf32> to vector<9x16xbf16>
    %cst_69 = arith.constant dense<0.000000e+00> : vector<9x16xf32>
    %131 = tpu.matmul %130, %7, %cst_69 {dimension_numbers = #tpu.dot_dimension_numbers<[1], [0], [0], [1], [0, 0, 1, 1], [], []>} : vector<9x16xbf16>, vector<16x16xbf16>, vector<9x16xf32> -> vector<9x16xf32>
    %132 = arith.subf %127, %129 : vector<9x16xf32>
    %133 = arith.addf %127, %131 : vector<9x16xf32>
    %134 = arith.mulf %132, %132 : vector<9x16xf32>
    %135 = arith.mulf %133, %133 : vector<9x16xf32>
    %136 = arith.addf %134, %135 : vector<9x16xf32>
    %137 = math.sqrt %136 : vector<9x16xf32>
    %138 = arith.addf %116, %137 : vector<9x16xf32>
    %c6 = arith.constant 6 : index
    %c0_70 = arith.constant 0 : index
    %c0_71 = arith.constant 0 : index
    %139 = vector.load %arg6[%c6, %c0_70, %c0_71] : memref<8x16x16xf32, #tpu.memory_space<vmem>>, vector<1x16x16xf32>
    %140 = vector.shape_cast %139 : vector<1x16x16xf32> to vector<16x16xf32>
    %c6_72 = arith.constant 6 : index
    %c0_73 = arith.constant 0 : index
    %c0_74 = arith.constant 0 : index
    %141 = vector.load %arg7[%c6_72, %c0_73, %c0_74] : memref<8x16x16xf32, #tpu.memory_space<vmem>>, vector<1x16x16xf32>
    %142 = vector.shape_cast %141 : vector<1x16x16xf32> to vector<16x16xf32>
    %143 = arith.subf %140, %142 : vector<16x16xf32>
    %144 = arith.truncf %143 : vector<16x16xf32> to vector<16x16xbf16>
    %cst_75 = arith.constant dense<0.000000e+00> : vector<9x16xf32>
    %145 = tpu.matmul %3, %144, %cst_75 {dimension_numbers = #tpu.dot_dimension_numbers<[1], [0], [0], [1], [0, 0, 1, 1], [], []>} : vector<9x16xbf16>, vector<16x16xbf16>, vector<9x16xf32> -> vector<9x16xf32>
    %cst_76 = arith.constant dense<0.000000e+00> : vector<9x16xf32>
    %146 = tpu.matmul %4, %144, %cst_76 {dimension_numbers = #tpu.dot_dimension_numbers<[1], [0], [0], [1], [0, 0, 1, 1], [], []>} : vector<9x16xbf16>, vector<16x16xbf16>, vector<9x16xf32> -> vector<9x16xf32>
    %147 = arith.addf %145, %146 : vector<9x16xf32>
    %148 = arith.truncf %147 : vector<9x16xf32> to vector<9x16xbf16>
    %cst_77 = arith.constant dense<0.000000e+00> : vector<9x16xf32>
    %149 = tpu.matmul %148, %5, %cst_77 {dimension_numbers = #tpu.dot_dimension_numbers<[1], [0], [0], [1], [0, 0, 1, 1], [], []>} : vector<9x16xbf16>, vector<16x16xbf16>, vector<9x16xf32> -> vector<9x16xf32>
    %150 = arith.truncf %146 : vector<9x16xf32> to vector<9x16xbf16>
    %cst_78 = arith.constant dense<0.000000e+00> : vector<9x16xf32>
    %151 = tpu.matmul %150, %6, %cst_78 {dimension_numbers = #tpu.dot_dimension_numbers<[1], [0], [0], [1], [0, 0, 1, 1], [], []>} : vector<9x16xbf16>, vector<16x16xbf16>, vector<9x16xf32> -> vector<9x16xf32>
    %152 = arith.truncf %145 : vector<9x16xf32> to vector<9x16xbf16>
    %cst_79 = arith.constant dense<0.000000e+00> : vector<9x16xf32>
    %153 = tpu.matmul %152, %7, %cst_79 {dimension_numbers = #tpu.dot_dimension_numbers<[1], [0], [0], [1], [0, 0, 1, 1], [], []>} : vector<9x16xbf16>, vector<16x16xbf16>, vector<9x16xf32> -> vector<9x16xf32>
    %154 = arith.subf %149, %151 : vector<9x16xf32>
    %155 = arith.addf %149, %153 : vector<9x16xf32>
    %156 = arith.mulf %154, %154 : vector<9x16xf32>
    %157 = arith.mulf %155, %155 : vector<9x16xf32>
    %158 = arith.addf %156, %157 : vector<9x16xf32>
    %159 = math.sqrt %158 : vector<9x16xf32>
    %160 = arith.addf %138, %159 : vector<9x16xf32>
    %c7 = arith.constant 7 : index
    %c0_80 = arith.constant 0 : index
    %c0_81 = arith.constant 0 : index
    %161 = vector.load %arg6[%c7, %c0_80, %c0_81] : memref<8x16x16xf32, #tpu.memory_space<vmem>>, vector<1x16x16xf32>
    %162 = vector.shape_cast %161 : vector<1x16x16xf32> to vector<16x16xf32>
    %c7_82 = arith.constant 7 : index
    %c0_83 = arith.constant 0 : index
    %c0_84 = arith.constant 0 : index
    %163 = vector.load %arg7[%c7_82, %c0_83, %c0_84] : memref<8x16x16xf32, #tpu.memory_space<vmem>>, vector<1x16x16xf32>
    %164 = vector.shape_cast %163 : vector<1x16x16xf32> to vector<16x16xf32>
    %165 = arith.subf %162, %164 : vector<16x16xf32>
    %166 = arith.truncf %165 : vector<16x16xf32> to vector<16x16xbf16>
    %cst_85 = arith.constant dense<0.000000e+00> : vector<9x16xf32>
    %167 = tpu.matmul %3, %166, %cst_85 {dimension_numbers = #tpu.dot_dimension_numbers<[1], [0], [0], [1], [0, 0, 1, 1], [], []>} : vector<9x16xbf16>, vector<16x16xbf16>, vector<9x16xf32> -> vector<9x16xf32>
    %cst_86 = arith.constant dense<0.000000e+00> : vector<9x16xf32>
    %168 = tpu.matmul %4, %166, %cst_86 {dimension_numbers = #tpu.dot_dimension_numbers<[1], [0], [0], [1], [0, 0, 1, 1], [], []>} : vector<9x16xbf16>, vector<16x16xbf16>, vector<9x16xf32> -> vector<9x16xf32>
    %169 = arith.addf %167, %168 : vector<9x16xf32>
    %170 = arith.truncf %169 : vector<9x16xf32> to vector<9x16xbf16>
    %cst_87 = arith.constant dense<0.000000e+00> : vector<9x16xf32>
    %171 = tpu.matmul %170, %5, %cst_87 {dimension_numbers = #tpu.dot_dimension_numbers<[1], [0], [0], [1], [0, 0, 1, 1], [], []>} : vector<9x16xbf16>, vector<16x16xbf16>, vector<9x16xf32> -> vector<9x16xf32>
    %172 = arith.truncf %168 : vector<9x16xf32> to vector<9x16xbf16>
    %cst_88 = arith.constant dense<0.000000e+00> : vector<9x16xf32>
    %173 = tpu.matmul %172, %6, %cst_88 {dimension_numbers = #tpu.dot_dimension_numbers<[1], [0], [0], [1], [0, 0, 1, 1], [], []>} : vector<9x16xbf16>, vector<16x16xbf16>, vector<9x16xf32> -> vector<9x16xf32>
    %174 = arith.truncf %167 : vector<9x16xf32> to vector<9x16xbf16>
    %cst_89 = arith.constant dense<0.000000e+00> : vector<9x16xf32>
    %175 = tpu.matmul %174, %7, %cst_89 {dimension_numbers = #tpu.dot_dimension_numbers<[1], [0], [0], [1], [0, 0, 1, 1], [], []>} : vector<9x16xbf16>, vector<16x16xbf16>, vector<9x16xf32> -> vector<9x16xf32>
    %176 = arith.subf %171, %173 : vector<9x16xf32>
    %177 = arith.addf %171, %175 : vector<9x16xf32>
    %178 = arith.mulf %176, %176 : vector<9x16xf32>
    %179 = arith.mulf %177, %177 : vector<9x16xf32>
    %180 = arith.addf %178, %179 : vector<9x16xf32>
    %181 = math.sqrt %180 : vector<9x16xf32>
    %182 = arith.addf %160, %181 : vector<9x16xf32>
    %c0_90 = arith.constant 0 : index
    %c0_91 = arith.constant 0 : index
    %183 = vector.load %arg9[%c0_90, %c0_91] : memref<9x16xf32, #tpu.memory_space<vmem>>, vector<9x16xf32>
    %184 = arith.addf %183, %182 : vector<9x16xf32>
    %c0_92 = arith.constant 0 : index
    %c0_93 = arith.constant 0 : index
    %185 = vector.load %arg9[%c0_92, %c0_93] : memref<9x16xf32, #tpu.memory_space<vmem>>, vector<9x16xf32>
    tpu.vector_store %arg9[%c0_92, %c0_93], %184 {strides = array<i32>} : memref<9x16xf32, #tpu.memory_space<vmem>>, vector<9x16xf32>,
    %c0_i32_94 = arith.constant 0 : i32
    %186 = arith.cmpi eq, %arg0, %c0_i32_94 : i32
    %187 = arith.extui %186 : i1 to i32
    %c0_i32_95 = arith.constant 0 : i32
    %188 = arith.cmpi ne, %187, %c0_i32_95 : i32
    scf.if %188 {
      %cst_96 = arith.constant 0.000000e+00 : f32
      %189 = vector.broadcast %cst_96 : f32 to vector<1x1xf32>
      %c0_97 = arith.constant 0 : index
      %c0_98 = arith.constant 0 : index
      %190 = vector.load %arg9[%c0_97, %c0_98] : memref<9x16xf32, #tpu.memory_space<vmem>>, vector<9x16xf32>
      %191 = vector.shape_cast %190 : vector<9x16xf32> to vector<1x9x16xf32>
      %cst_99 = arith.constant dense<0.000000e+00> : vector<1xf32>
      %192 = vector.multi_reduction <add>, %191, %cst_99 [1, 2] : vector<1x9x16xf32> to vector<1xf32>
      %193 = vector.shape_cast %192 : vector<1xf32> to vector<1x1x1xf32>
      %194 = vector.extract %193[0, 0, 0] : f32 from vector<1x1x1xf32>
      %195 = vector.broadcast %194 : f32 to vector<1x1xf32>
      %196 = arith.addf %189, %195 : vector<1x1xf32>
      %c0_100 = arith.constant 0 : index
      %c0_101 = arith.constant 0 : index
      %197 = vector.load %arg8[%c0_100, %c0_101] : memref<1x1xf32, #tpu.memory_space<vmem>>, vector<1x1xf32>
      tpu.vector_store %arg8[%c0_100, %c0_101], %196 {strides = array<i32>} : memref<1x1xf32, #tpu.memory_space<vmem>>, vector<1x1xf32>,
    } else {
    }
    return
  }
  func.func @transform_0(%arg0: i32) -> (i32, i32) {
    %c0_i32 = arith.constant 0 : i32
    %c0_i32_0 = arith.constant 0 : i32
    %c0_i32_1 = arith.constant 0 : i32
    return %c0_i32, %c0_i32_0 : i32, i32
  }
  func.func @transform_1(%arg0: i32) -> (i32, i32) {
    %c0_i32 = arith.constant 0 : i32
    %c0_i32_0 = arith.constant 0 : i32
    %c0_i32_1 = arith.constant 0 : i32
    return %c0_i32, %c0_i32_0 : i32, i32
  }
  func.func @transform_2(%arg0: i32) -> (i32, i32) {
    %c0_i32 = arith.constant 0 : i32
    %c0_i32_0 = arith.constant 0 : i32
    %c0_i32_1 = arith.constant 0 : i32
    return %c0_i32, %c0_i32_0 : i32, i32
  }
  func.func @transform_3(%arg0: i32) -> (i32, i32) {
    %c0_i32 = arith.constant 0 : i32
    %c0_i32_0 = arith.constant 0 : i32
    %c0_i32_1 = arith.constant 0 : i32
    return %c0_i32, %c0_i32_0 : i32, i32
  }
  func.func @transform_4(%arg0: i32) -> (i32, i32) {
    %c0_i32 = arith.constant 0 : i32
    %c0_i32_0 = arith.constant 0 : i32
    %c0_i32_1 = arith.constant 0 : i32
    return %c0_i32, %c0_i32_0 : i32, i32
  }
  func.func @transform_5(%arg0: i32) -> (i32, i32, i32) {
    %c0_i32 = arith.constant 0 : i32
    %c0_i32_0 = arith.constant 0 : i32
    %c0_i32_1 = arith.constant 0 : i32
    return %arg0, %c0_i32, %c0_i32_0 : i32, i32, i32
  }
  func.func @transform_6(%arg0: i32) -> (i32, i32, i32) {
    %c0_i32 = arith.constant 0 : i32
    %c0_i32_0 = arith.constant 0 : i32
    %c0_i32_1 = arith.constant 0 : i32
    return %arg0, %c0_i32, %c0_i32_0 : i32, i32, i32
  }
  func.func @transform_7(%arg0: i32) -> (i32, i32) {
    %c0_i32 = arith.constant 0 : i32
    %c0_i32_0 = arith.constant 0 : i32
    %c0_i32_1 = arith.constant 0 : i32
    return %c0_i32, %c0_i32_0 : i32, i32
  }
}

</mosaic_0001>

<llo_original>
// kernel: tpu_custom_call.1
$region0: #{tpu_custom_call.1}
  #allocation0 [shape = 'u32[]', space=smem, size = 0x4, offset = 0x4, fixed_abs, tag = 'smem constant byte address 0x4 - core index']
  #allocation1 [shape = 'u32[144,128]{1,0:T(1,128)}', space=vmem, size = 0x12000, scoped, tag = 'internal scratch']
  #allocation2 [shape = 'f32[9,16]{1,0:T(8,128)}', space=vmem, size = 0x2000, scoped, tag = 'scratch operand']
  %s0 = inlined_call_operand.hbm [shape: bf16[9,16], index: 0, kind: input, shape index: {}]
  %s1 = inlined_call_operand.hbm [shape: bf16[9,16], index: 1, kind: input, shape index: {}]
  %s2 = inlined_call_operand.hbm [shape: bf16[16,16], index: 2, kind: input, shape index: {}]
  %s3 = inlined_call_operand.vmem [shape: bf16[16,16], index: 3, kind: input, shape index: {}]
  %s4 = inlined_call_operand.hbm [shape: bf16[16,16], index: 4, kind: input, shape index: {}]
  %s5 = inlined_call_operand.hbm [shape: f32[8,16,16], index: 5, kind: input, shape index: {}]
  %s6 = inlined_call_operand.hbm [shape: f32[8,16,16], index: 6, kind: input, shape index: {}]
  %s7 = inlined_call_operand.hbm [shape: f32[1,1], index: 7, kind: output, shape index: {}]
  %s8 = sld [smem:[#allocation0]]
  $region70: #{tpu_custom_call.1} parent=0
    _
  %s10 = ssub.s32 1, %s8
  %s11 = scalar_select 0, %s10, %s8
  $region1: #{tpu_custom_call.1} parent=0
    #allocation3 [shape = 'u8[4096]{0}', space=vmem, size = 0x1000, scoped, tag = 'input window, operand 0, single buffered']
    #allocation4 [shape = 's32[1]{0}', space=sflag, size = 0x4, scoped, tag = 'scoped memory for tpu_custom_call.1']
    #allocation5 [shape = 's32[1]{0}', space=sflag, size = 0x4, scoped, tag = 'scoped memory for tpu_custom_call.1']
    #allocation6 [shape = 'u8[4096]{0}', space=vmem, size = 0x1000, scoped, tag = 'input window, operand 1, single buffered']
    #allocation7 [shape = 's32[1]{0}', space=sflag, size = 0x4, scoped, tag = 'scoped memory for tpu_custom_call.1']
    #allocation8 [shape = 'u8[4096]{0}', space=vmem, size = 0x1000, scoped, tag = 'input window, operand 2, single buffered']
    #allocation9 [shape = 'u8[4096]{0}', space=vmem, size = 0x1000, scoped, tag = 'input window, operand 4, single buffered']
    #allocation10 [shape = 's32[1]{0}', space=sflag, size = 0x4, scoped, tag = 'scoped memory for tpu_custom_call.1']
    #allocation11 [shape = 'u8[65536]{0}', space=vmem, size = 0x10000, scoped, tag = 'input window, operand 5, single buffered']
    #allocation12 [shape = 'u8[65536]{0}', space=vmem, size = 0x10000, scoped, tag = 'input window, operand 6, single buffered']
    #allocation13 [shape = 's32[1]{0}', space=sflag, size = 0x4, scoped, tag = 'scoped memory for tpu_custom_call.1']
    #allocation14 [shape = 'u8[512]{0}', space=vmem, size = 0x400, scoped, tag = 'output window, operand 0, single buffered']
    %12 = vsyncpa [#allocation4], 0
    %13 = vsyncpa [#allocation7], 0
    %14 = vsyncpa [#allocation10], 0
    %15 = vsyncpa [#allocation13], 0
    %16 = vsyncpa [#allocation5], 0
    // Predicated region
    $region2: #{tpu_custom_call.1} parent=1 // pred_check
      _
    $region3: #{tpu_custom_call.1} parent=1 // pred_check_branch
      %18 = sbr.rel (0) target = $region5
    $region4: #{tpu_custom_call.1} parent=1 // pred_region
      %s20 = ssub.s32 128, 128
      %21 = vsyncadd [#allocation4], %s20
      %s22 = sshll.u32 [#allocation3], 4
      %s23 = int_to_ptr.vmem [resolvable:$true] %s22
      %28 = dma.hbm_to_vmem [thread:$0]  %s0, 128, %s23, [#allocation4], 64, 64, 4
    $region5: #{tpu_custom_call.1} parent=1 // pred_fallthru
      _
    // Predicated region
    $region6: #{tpu_custom_call.1} parent=1 // pred_check
      _
    $region7: #{tpu_custom_call.1} parent=1 // pred_check_branch
      %30 = sbr.rel (0) target = $region9
    $region8: #{tpu_custom_call.1} parent=1 // pred_region
      %s32 = ssub.s32 128, 128
      %33 = vsyncadd [#allocation7], %s32
      %s34 = sshll.u32 [#allocation6], 4
      %s35 = int_to_ptr.vmem [resolvable:$true] %s34
      %40 = dma.hbm_to_vmem [thread:$0]  %s1, 128, %s35, [#allocation7], 64, 64, 4
    $region9: #{tpu_custom_call.1} parent=1 // pred_fallthru
      _
    // Predicated region
    $region10: #{tpu_custom_call.1} parent=1 // pred_check
      _
    $region11: #{tpu_custom_call.1} parent=1 // pred_check_branch
      %42 = sbr.rel (0) target = $region13
    $region12: #{tpu_custom_call.1} parent=1 // pred_region
      %s44 = ssub.s32 128, 128
      %45 = vsyncadd [#allocation7], %s44
      %s46 = sshll.u32 [#allocation8], 4
      %s47 = int_to_ptr.vmem [resolvable:$true] %s46
      %52 = dma.hbm_to_vmem [thread:$0]  %s2, 128, %s47, [#allocation7], 64, 64, 4
    $region13: #{tpu_custom_call.1} parent=1 // pred_fallthru
      _
    // Predicated region
    $region14: #{tpu_custom_call.1} parent=1 // pred_check
      _
    $region15: #{tpu_custom_call.1} parent=1 // pred_check_branch
      %54 = sbr.rel (0) target = $region17
    $region16: #{tpu_custom_call.1} parent=1 // pred_region
      _
    $region17: #{tpu_custom_call.1} parent=1 // pred_fallthru
      _
    // Predicated region
    $region18: #{tpu_custom_call.1} parent=1 // pred_check
      _
    $region19: #{tpu_custom_call.1} parent=1 // pred_check_branch
      %56 = sbr.rel (0) target = $region21
    $region20: #{tpu_custom_call.1} parent=1 // pred_region
      %s58 = ssub.s32 128, 128
      %59 = vsyncadd [#allocation10], %s58
      %s60 = sshll.u32 [#allocation9], 4
      %s61 = int_to_ptr.vmem [resolvable:$true] %s60
      %66 = dma.hbm_to_vmem [thread:$0]  %s4, 128, %s61, [#allocation10], 64, 64, 4
    $region21: #{tpu_custom_call.1} parent=1 // pred_fallthru
      _
    // Predicated region
    $region22: #{tpu_custom_call.1} parent=1 // pred_check
      _
    $region23: #{tpu_custom_call.1} parent=1 // pred_check_branch
      %68 = sbr.rel (0) target = $region25
    $region24: #{tpu_custom_call.1} parent=1 // pred_region
      %s70 = ssub.s32 2048, 2048
      %71 = vsyncadd [#allocation10], %s70
      %s72 = sshll.u32 [#allocation11], 4
      %s73 = int_to_ptr.vmem [resolvable:$true] %s72
      %78 = dma.hbm_to_vmem [thread:$0]  %s5, 2048, %s73, [#allocation10], 128, 128, 8
    $region25: #{tpu_custom_call.1} parent=1 // pred_fallthru
      _
    // Predicated region
    $region26: #{tpu_custom_call.1} parent=1 // pred_check
      _
    $region27: #{tpu_custom_call.1} parent=1 // pred_check_branch
      %80 = sbr.rel (0) target = $region29
    $region28: #{tpu_custom_call.1} parent=1 // pred_region
      %s82 = ssub.s32 2048, 2048
      %83 = vsyncadd [#allocation13], %s82
      %s84 = sshll.u32 [#allocation12], 4
      %s85 = int_to_ptr.vmem [resolvable:$true] %s84
      %90 = dma.hbm_to_vmem [thread:$0]  %s6, 2048, %s85, [#allocation13], 128, 128, 8
    $region29: #{tpu_custom_call.1} parent=1 // pred_fallthru
      _
    // Predicated region
    $region30: #{tpu_custom_call.1} parent=1 // pred_check
      _
    $region31: #{tpu_custom_call.1} parent=1 // pred_check_branch
      %92 = sbr.rel (0) target = $region33
    $region32: #{tpu_custom_call.1} parent=1 // pred_region
      %93 = dma.done [#allocation4], 128
    $region33: #{tpu_custom_call.1} parent=1 // pred_fallthru
      _
    // Predicated region
    $region34: #{tpu_custom_call.1} parent=1 // pred_check
      _
    $region35: #{tpu_custom_call.1} parent=1 // pred_check_branch
      %95 = sbr.rel (0) target = $region37
    $region36: #{tpu_custom_call.1} parent=1 // pred_region
      %96 = dma.done [#allocation7], 128
    $region37: #{tpu_custom_call.1} parent=1 // pred_fallthru
      _
    // Predicated region
    $region38: #{tpu_custom_call.1} parent=1 // pred_check
      _
    $region39: #{tpu_custom_call.1} parent=1 // pred_check_branch
      %98 = sbr.rel (0) target = $region41
    $region40: #{tpu_custom_call.1} parent=1 // pred_region
      %99 = dma.done [#allocation7], 128
    $region41: #{tpu_custom_call.1} parent=1 // pred_fallthru
      _
    // Predicated region
    $region42: #{tpu_custom_call.1} parent=1 // pred_check
      _
    $region43: #{tpu_custom_call.1} parent=1 // pred_check_branch
      %101 = sbr.rel (0) target = $region45
    $region44: #{tpu_custom_call.1} parent=1 // pred_region
      %102 = dma.done [#allocation10], 128
    $region45: #{tpu_custom_call.1} parent=1 // pred_fallthru
      _
    // Predicated region
    $region46: #{tpu_custom_call.1} parent=1 // pred_check
      _
    $region47: #{tpu_custom_call.1} parent=1 // pred_check_branch
      %104 = sbr.rel (0) target = $region49
    $region48: #{tpu_custom_call.1} parent=1 // pred_region
      %105 = dma.done [#allocation10], 2048
    $region49: #{tpu_custom_call.1} parent=1 // pred_fallthru
      _
    // Predicated region
    $region50: #{tpu_custom_call.1} parent=1 // pred_check
      _
    $region51: #{tpu_custom_call.1} parent=1 // pred_check_branch
      %107 = sbr.rel (0) target = $region53
    $region52: #{tpu_custom_call.1} parent=1 // pred_region
      %108 = dma.done [#allocation13], 2048
    $region53: #{tpu_custom_call.1} parent=1 // pred_fallthru
      _
    %p110 = scmp.eq.s32.totalorder 0, 0
    // Predicated region
    $region54: #{tpu_custom_call.1} parent=1 // pred_check
      %p111 = pneg %p110
    $region55: #{tpu_custom_call.1} parent=1 // pred_check_branch
      %113 = sbr.rel (%p111) target = $region57
    $region56: #{tpu_custom_call.1} parent=1 // pred_region
      %vm114 = vcmask 130048
      %115 = vst.msk [vmem:[#allocation2] sm:$0xff] %vm114, 0.0
      %vm116 = vcmask 122880
      %117 = vst.msk [vmem:[#allocation2 + $0x8] sm:$0x1] %vm116, 0.0
    $region57: #{tpu_custom_call.1} parent=1 // pred_fallthru
      _
    %v118 = vld [vmem:[#allocation3] sm:$0xf]
    %v119 = vld [vmem:[#allocation3 + $0x4] sm:$0x1]
    %v120 = vld [vmem:[#allocation6] sm:$0xf]
    %v121 = vld [vmem:[#allocation6 + $0x4] sm:$0x1]
    %v122 = vld [vmem:[#allocation8] sm:$0xf]
    %v123 = vld [vmem:[#allocation8 + $0x4] sm:$0xf]
    %v124 = vld [vmem:[%s3] sm:$0xf]
    %v125 = vld [vmem:[%s3 + $0x4] sm:$0xf]
    %v126 = vld [vmem:[#allocation9] sm:$0xf]
    %v127 = vld [vmem:[#allocation9 + $0x4] sm:$0xf]
    %v128 = vld [vmem:[#allocation11] sm:$0xff]
    %v129 = vld [vmem:[#allocation11 + $0x8] sm:$0xff]
    %v130 = vld [vmem:[#allocation12] sm:$0xff]
    %v131 = vld [vmem:[#allocation12 + $0x8] sm:$0xff]
    %v132 = vsub.f32 %v128, %v130
    %v133 = vsub.f32 %v129, %v131
    %v134 = vpack.c.bf16 %v133, %v132
    %v137 = vunpack.c.l.b16 %v118
    %v138 = vunpack.c.l.b16 %v119
    %v139 = vpack.c.b16 %v138, %v137
    %vm140 = vcmask 130048
    %v142 = vsel %vm140, %v139, 0
    %144 = vmatprep.subr.bf16.mxu0 0
    %145 = vmatpush1.bf16.msra.mxu0 %v134
    %146 = vmatprep.subr.bf16.mxu0 0
    %147 = vmatpush1.bf16.msra.mxu0 0
    %148 = vmatprep.subr.bf16.mxu0 0
    %149 = vmatpush1.bf16.msra.mxu0 0
    %150 = vmatprep.subr.bf16.mxu0 0
    %151 = vmatpush1.bf16.msra.mxu0 0
    %152 = vmatprep.subr.bf16.mxu0 0
    %153 = vmatpush1.bf16.msra.mxu0 0
    %154 = vmatprep.subr.bf16.mxu0 0
    %155 = vmatpush1.bf16.msra.mxu0 0
    %156 = vmatprep.subr.bf16.mxu0 0
    %157 = vmatpush1.bf16.msra.mxu0 0
    %158 = vmatprep.subr.bf16.mxu0 0
    %159 = vmatpush1.bf16.msra.mxu0 0
    %160 = vmatprep.subr.bf16.mxu0 0
    %161 = vmatpush1.bf16.msra.mxu0 0
    %162 = vmatprep.subr.bf16.mxu0 0
    %163 = vmatpush1.bf16.msra.mxu0 0
    %164 = vmatprep.subr.bf16.mxu0 0
    %165 = vmatpush1.bf16.msra.mxu0 0
    %166 = vmatprep.subr.bf16.mxu0 0
    %167 = vmatpush1.bf16.msra.mxu0 0
    %168 = vmatprep.subr.bf16.mxu0 0
    %169 = vmatpush1.bf16.msra.mxu0 0
    %170 = vmatprep.subr.bf16.mxu0 0
    %171 = vmatpush1.bf16.msra.mxu0 0
    %172 = vmatprep.subr.bf16.mxu0 0
    %173 = vmatpush1.bf16.msra.mxu0 0
    %174 = vmatprep.subr.bf16.mxu0 0
    %175 = vmatpush1.bf16.msra.mxu0 0
    %176 = vmatprep.mubr.bf16.mxu0 0
    %177 = vmatmul.mubr.bf16.gmra.mrb[0].mxu0 %v142
    %v178 = vpop.f32.mrb[0].mxu0
    %v179 = vadd.f32 0.0, %v178
    %v180 = vpop.f32.mrb[0].mxu0
    %v181 = vpop.f32.mrb[0].mxu0
    %v182 = vadd.f32 0.0, %v181
    %v183 = vpop.f32.mrb[0].mxu0
    %184 = vdwg.mxu0
    %v187 = vunpack.c.l.b16 %v120
    %v188 = vunpack.c.l.b16 %v121
    %v189 = vpack.c.b16 %v188, %v187
    %v191 = vsel %vm140, %v189, 0
    %193 = vmatprep.subr.bf16.mxu0 0
    %194 = vmatpush1.bf16.msra.mxu0 %v134
    %195 = vmatprep.subr.bf16.mxu0 0
    %196 = vmatpush1.bf16.msra.mxu0 0
    %197 = vmatprep.subr.bf16.mxu0 0
    %198 = vmatpush1.bf16.msra.mxu0 0
    %199 = vmatprep.subr.bf16.mxu0 0
    %200 = vmatpush1.bf16.msra.mxu0 0
    %201 = vmatprep.subr.bf16.mxu0 0
    %202 = vmatpush1.bf16.msra.mxu0 0
    %203 = vmatprep.subr.bf16.mxu0 0
    %204 = vmatpush1.bf16.msra.mxu0 0
    %205 = vmatprep.subr.bf16.mxu0 0
    %206 = vmatpush1.bf16.msra.mxu0 0
    %207 = vmatprep.subr.bf16.mxu0 0
    %208 = vmatpush1.bf16.msra.mxu0 0
    %209 = vmatprep.subr.bf16.mxu0 0
    %210 = vmatpush1.bf16.msra.mxu0 0
    %211 = vmatprep.subr.bf16.mxu0 0
    %212 = vmatpush1.bf16.msra.mxu0 0
    %213 = vmatprep.subr.bf16.mxu0 0
    %214 = vmatpush1.bf16.msra.mxu0 0
    %215 = vmatprep.subr.bf16.mxu0 0
    %216 = vmatpush1.bf16.msra.mxu0 0
    %217 = vmatprep.subr.bf16.mxu0 0
    %218 = vmatpush1.bf16.msra.mxu0 0
    %219 = vmatprep.subr.bf16.mxu0 0
    %220 = vmatpush1.bf16.msra.mxu0 0
    %221 = vmatprep.subr.bf16.mxu0 0
    %222 = vmatpush1.bf16.msra.mxu0 0
    %223 = vmatprep.subr.bf16.mxu0 0
    %224 = vmatpush1.bf16.msra.mxu0 0
    %225 = vmatprep.mubr.bf16.mxu0 0
    %226 = vmatmul.mubr.bf16.gmra.mrb[0].mxu0 %v191
    %v227 = vpop.f32.mrb[0].mxu0
    %v228 = vadd.f32 0.0, %v227
    %v229 = vpop.f32.mrb[0].mxu0
    %v230 = vpop.f32.mrb[0].mxu0
    %v231 = vadd.f32 0.0, %v230
    %v232 = vpop.f32.mrb[0].mxu0
    %233 = vdwg.mxu0
    %v234 = vadd.f32 %v179, %v228
    %v235 = vadd.f32 %v182, %v231
    %v236 = vpack.c.bf16 %v235, %v234
    %v239 = vunpack.c.l.b16 %v122
    %v240 = vunpack.c.l.b16 %v123
    %v241 = vpack.c.b16 %v240, %v239
    %v244 = vsel %vm140, %v236, 0
    %246 = vmatprep.subr.bf16.mxu0 0
    %247 = vmatpush1.bf16.msra.mxu0 %v241
    %248 = vmatprep.subr.bf16.mxu0 0
    %249 = vmatpush1.bf16.msra.mxu0 0
    %250 = vmatprep.subr.bf16.mxu0 0
    %251 = vmatpush1.bf16.msra.mxu0 0
    %252 = vmatprep.subr.bf16.mxu0 0
    %253 = vmatpush1.bf16.msra.mxu0 0
    %254 = vmatprep.subr.bf16.mxu0 0
    %255 = vmatpush1.bf16.msra.mxu0 0
    %256 = vmatprep.subr.bf16.mxu0 0
    %257 = vmatpush1.bf16.msra.mxu0 0
    %258 = vmatprep.subr.bf16.mxu0 0
    %259 = vmatpush1.bf16.msra.mxu0 0
    %260 = vmatprep.subr.bf16.mxu0 0
    %261 = vmatpush1.bf16.msra.mxu0 0
    %262 = vmatprep.subr.bf16.mxu0 0
    %263 = vmatpush1.bf16.msra.mxu0 0
    %264 = vmatprep.subr.bf16.mxu0 0
    %265 = vmatpush1.bf16.msra.mxu0 0
    %266 = vmatprep.subr.bf16.mxu0 0
    %267 = vmatpush1.bf16.msra.mxu0 0
    %268 = vmatprep.subr.bf16.mxu0 0
    %269 = vmatpush1.bf16.msra.mxu0 0
    %270 = vmatprep.subr.bf16.mxu0 0
    %271 = vmatpush1.bf16.msra.mxu0 0
    %272 = vmatprep.subr.bf16.mxu0 0
    %273 = vmatpush1.bf16.msra.mxu0 0
    %274 = vmatprep.subr.bf16.mxu0 0
    %275 = vmatpush1.bf16.msra.mxu0 0
    %276 = vmatprep.subr.bf16.mxu0 0
    %277 = vmatpush1.bf16.msra.mxu0 0
    %278 = vmatprep.mubr.bf16.mxu0 0
    %279 = vmatmul.mubr.bf16.gmra.mrb[0].mxu0 %v244
    %v280 = vpop.f32.mrb[0].mxu0
    %v281 = vadd.f32 0.0, %v280
    %v282 = vpop.f32.mrb[0].mxu0
    %v283 = vpop.f32.mrb[0].mxu0
    %v284 = vadd.f32 0.0, %v283
    %v285 = vpop.f32.mrb[0].mxu0
    %286 = vdwg.mxu0
    %v287 = vpack.c.bf16 %v231, %v228
    %v290 = vunpack.c.l.b16 %v124
    %v291 = vunpack.c.l.b16 %v125
    %v292 = vpack.c.b16 %v291, %v290
    %v295 = vsel %vm140, %v287, 0
    %297 = vmatprep.subr.bf16.mxu0 0
    %298 = vmatpush1.bf16.msra.mxu0 %v292
    %299 = vmatprep.subr.bf16.mxu0 0
    %300 = vmatpush1.bf16.msra.mxu0 0
    %301 = vmatprep.subr.bf16.mxu0 0
    %302 = vmatpush1.bf16.msra.mxu0 0
    %303 = vmatprep.subr.bf16.mxu0 0
    %304 = vmatpush1.bf16.msra.mxu0 0
    %305 = vmatprep.subr.bf16.mxu0 0
    %306 = vmatpush1.bf16.msra.mxu0 0
    %307 = vmatprep.subr.bf16.mxu0 0
    %308 = vmatpush1.bf16.msra.mxu0 0
    %309 = vmatprep.subr.bf16.mxu0 0
    %310 = vmatpush1.bf16.msra.mxu0 0
    %311 = vmatprep.subr.bf16.mxu0 0
    %312 = vmatpush1.bf16.msra.mxu0 0
    %313 = vmatprep.subr.bf16.mxu0 0
    %314 = vmatpush1.bf16.msra.mxu0 0
    %315 = vmatprep.subr.bf16.mxu0 0
    %316 = vmatpush1.bf16.msra.mxu0 0
    %317 = vmatprep.subr.bf16.mxu0 0
    %318 = vmatpush1.bf16.msra.mxu0 0
    %319 = vmatprep.subr.bf16.mxu0 0
    %320 = vmatpush1.bf16.msra.mxu0 0
    %321 = vmatprep.subr.bf16.mxu0 0
    %322 = vmatpush1.bf16.msra.mxu0 0
    %323 = vmatprep.subr.bf16.mxu0 0
    %324 = vmatpush1.bf16.msra.mxu0 0
    %325 = vmatprep.subr.bf16.mxu0 0
    %326 = vmatpush1.bf16.msra.mxu0 0
    %327 = vmatprep.subr.bf16.mxu0 0
    %328 = vmatpush1.bf16.msra.mxu0 0
    %329 = vmatprep.mubr.bf16.mxu0 0
    %330 = vmatmul.mubr.bf16.gmra.mrb[0].mxu0 %v295
    %v331 = vpop.f32.mrb[0].mxu0
    %v332 = vadd.f32 0.0, %v331
    %v333 = vpop.f32.mrb[0].mxu0
    %v334 = vpop.f32.mrb[0].mxu0
    %v335 = vadd.f32 0.0, %v334
    %v336 = vpop.f32.mrb[0].mxu0
    %337 = vdwg.mxu0
    %v338 = vpack.c.bf16 %v182, %v179
    %v341 = vunpack.c.l.b16 %v126
    %v342 = vunpack.c.l.b16 %v127
    %v343 = vpack.c.b16 %v342, %v341
    %v346 = vsel %vm140, %v338, 0
    %348 = vmatprep.subr.bf16.mxu0 0
    %349 = vmatpush1.bf16.msra.mxu0 %v343
    %350 = vmatprep.subr.bf16.mxu0 0
    %351 = vmatpush1.bf16.msra.mxu0 0
    %352 = vmatprep.subr.bf16.mxu0 0
    %353 = vmatpush1.bf16.msra.mxu0 0
    %354 = vmatprep.subr.bf16.mxu0 0
    %355 = vmatpush1.bf16.msra.mxu0 0
    %356 = vmatprep.subr.bf16.mxu0 0
    %357 = vmatpush1.bf16.msra.mxu0 0
    %358 = vmatprep.subr.bf16.mxu0 0
    %359 = vmatpush1.bf16.msra.mxu0 0
    %360 = vmatprep.subr.bf16.mxu0 0
    %361 = vmatpush1.bf16.msra.mxu0 0
    %362 = vmatprep.subr.bf16.mxu0 0
    %363 = vmatpush1.bf16.msra.mxu0 0
    %364 = vmatprep.subr.bf16.mxu0 0
    %365 = vmatpush1.bf16.msra.mxu0 0
    %366 = vmatprep.subr.bf16.mxu0 0
    %367 = vmatpush1.bf16.msra.mxu0 0
    %368 = vmatprep.subr.bf16.mxu0 0
    %369 = vmatpush1.bf16.msra.mxu0 0
    %370 = vmatprep.subr.bf16.mxu0 0
    %371 = vmatpush1.bf16.msra.mxu0 0
    %372 = vmatprep.subr.bf16.mxu0 0
    %373 = vmatpush1.bf16.msra.mxu0 0
    %374 = vmatprep.subr.bf16.mxu0 0
    %375 = vmatpush1.bf16.msra.mxu0 0
    %376 = vmatprep.subr.bf16.mxu0 0
    %377 = vmatpush1.bf16.msra.mxu0 0
    %378 = vmatprep.subr.bf16.mxu0 0
    %379 = vmatpush1.bf16.msra.mxu0 0
    %380 = vmatprep.mubr.bf16.mxu0 0
    %381 = vmatmul.mubr.bf16.gmra.mrb[0].mxu0 %v346
    %v382 = vpop.f32.mrb[0].mxu0
    %v383 = vadd.f32 0.0, %v382
    %v384 = vpop.f32.mrb[0].mxu0
    %v385 = vpop.f32.mrb[0].mxu0
    %v386 = vadd.f32 0.0, %v385
    %v387 = vpop.f32.mrb[0].mxu0
    %388 = vdwg.mxu0
    %v389 = vsub.f32 %v281, %v332
    %v390 = vsub.f32 %v284, %v335
    %v391 = vadd.f32 %v281, %v383
    %v392 = vadd.f32 %v284, %v386
    %v393 = vmul.f32 %v389, %v389
    %v394 = vmul.f32 %v390, %v390
    %v395 = vmul.f32 %v391, %v391
    %v396 = vmul.f32 %v392, %v392
    %v397 = vadd.f32 %v393, %v395
    %v398 = vadd.f32 %v394, %v396
    %v399 = vrsqrt.pop %v397
    %v400 = vmul.f32 %v397, %v399
    %vm401 = vcmp.eq.f32.partialorder %v397, inf
    %v402 = vsel %vm401, %v397, %v400
    %vm403 = vcmp.eq.f32.partialorder %v397, 0.0
    %v404 = vand.u32 %v397, 2147483648
    %v405 = vsel %vm403, %v404, %v402
    %v406 = vrsqrt.pop %v398
    %v407 = vmul.f32 %v398, %v406
    %vm408 = vcmp.eq.f32.partialorder %v398, inf
    %v409 = vsel %vm408, %v398, %v407
    %vm410 = vcmp.eq.f32.partialorder %v398, 0.0
    %v411 = vand.u32 %v398, 2147483648
    %v412 = vsel %vm410, %v411, %v409
    %s413 = scalar_lea.vmem [#allocation11], 16
    %v414 = vld [vmem:[%s413] sm:$0xff]
    %v415 = vld [vmem:[%s413 + $0x8] sm:$0xff]
    %s416 = scalar_lea.vmem [#allocation12], 16
    %v417 = vld [vmem:[%s416] sm:$0xff]
    %v418 = vld [vmem:[%s416 + $0x8] sm:$0xff]
    %v419 = vsub.f32 %v414, %v417
    %v420 = vsub.f32 %v415, %v418
    %v421 = vpack.c.bf16 %v420, %v419
    %422 = vmatprep.subr.bf16.mxu0 0
    %423 = vmatpush1.bf16.msra.mxu0 %v421
    %424 = vmatprep.subr.bf16.mxu0 0
    %425 = vmatpush1.bf16.msra.mxu0 0
    %426 = vmatprep.subr.bf16.mxu0 0
    %427 = vmatpush1.bf16.msra.mxu0 0
    %428 = vmatprep.subr.bf16.mxu0 0
    %429 = vmatpush1.bf16.msra.mxu0 0
    %430 = vmatprep.subr.bf16.mxu0 0
    %431 = vmatpush1.bf16.msra.mxu0 0
    %432 = vmatprep.subr.bf16.mxu0 0
    %433 = vmatpush1.bf16.msra.mxu0 0
    %434 = vmatprep.subr.bf16.mxu0 0
    %435 = vmatpush1.bf16.msra.mxu0 0
    %436 = vmatprep.subr.bf16.mxu0 0
    %437 = vmatpush1.bf16.msra.mxu0 0
    %438 = vmatprep.subr.bf16.mxu0 0
    %439 = vmatpush1.bf16.msra.mxu0 0
    %440 = vmatprep.subr.bf16.mxu0 0
    %441 = vmatpush1.bf16.msra.mxu0 0
    %442 = vmatprep.subr.bf16.mxu0 0
    %443 = vmatpush1.bf16.msra.mxu0 0
    %444 = vmatprep.subr.bf16.mxu0 0
    %445 = vmatpush1.bf16.msra.mxu0 0
    %446 = vmatprep.subr.bf16.mxu0 0
    %447 = vmatpush1.bf16.msra.mxu0 0
    %448 = vmatprep.subr.bf16.mxu0 0
    %449 = vmatpush1.bf16.msra.mxu0 0
    %450 = vmatprep.subr.bf16.mxu0 0
    %451 = vmatpush1.bf16.msra.mxu0 0
    %452 = vmatprep.subr.bf16.mxu0 0
    %453 = vmatpush1.bf16.msra.mxu0 0
    %454 = vmatprep.mubr.bf16.mxu0 0
    %455 = vmatmul.mubr.bf16.gmra.mrb[0].mxu0 %v142
    %v456 = vpop.f32.mrb[0].mxu0
    %v457 = vadd.f32 0.0, %v456
    %v458 = vpop.f32.mrb[0].mxu0
    %v459 = vpop.f32.mrb[0].mxu0
    %v460 = vadd.f32 0.0, %v459
    %v461 = vpop.f32.mrb[0].mxu0
    %462 = vdwg.mxu0
    %463 = vmatprep.subr.bf16.mxu0 0
    %464 = vmatpush1.bf16.msra.mxu0 %v421
    %465 = vmatprep.subr.bf16.mxu0 0
    %466 = vmatpush1.bf16.msra.mxu0 0
    %467 = vmatprep.subr.bf16.mxu0 0
    %468 = vmatpush1.bf16.msra.mxu0 0
    %469 = vmatprep.subr.bf16.mxu0 0
    %470 = vmatpush1.bf16.msra.mxu0 0
    %471 = vmatprep.subr.bf16.mxu0 0
    %472 = vmatpush1.bf16.msra.mxu0 0
    %473 = vmatprep.subr.bf16.mxu0 0
    %474 = vmatpush1.bf16.msra.mxu0 0
    %475 = vmatprep.subr.bf16.mxu0 0
    %476 = vmatpush1.bf16.msra.mxu0 0
    %477 = vmatprep.subr.bf16.mxu0 0
    %478 = vmatpush1.bf16.msra.mxu0 0
    %479 = vmatprep.subr.bf16.mxu0 0
    %480 = vmatpush1.bf16.msra.mxu0 0
    %481 = vmatprep.subr.bf16.mxu0 0
    %482 = vmatpush1.bf16.msra.mxu0 0
    %483 = vmatprep.subr.bf16.mxu0 0
    %484 = vmatpush1.bf16.msra.mxu0 0
    %485 = vmatprep.subr.bf16.mxu0 0
    %486 = vmatpush1.bf16.msra.mxu0 0
    %487 = vmatprep.subr.bf16.mxu0 0
    %488 = vmatpush1.bf16.msra.mxu0 0
    %489 = vmatprep.subr.bf16.mxu0 0
    %490 = vmatpush1.bf16.msra.mxu0 0
    %491 = vmatprep.subr.bf16.mxu0 0
    %492 = vmatpush1.bf16.msra.mxu0 0
    %493 = vmatprep.subr.bf16.mxu0 0
    %494 = vmatpush1.bf16.msra.mxu0 0
    %495 = vmatprep.mubr.bf16.mxu0 0
    %496 = vmatmul.mubr.bf16.gmra.mrb[0].mxu0 %v191
    %v497 = vpop.f32.mrb[0].mxu0
    %v498 = vadd.f32 0.0, %v497
    %v499 = vpop.f32.mrb[0].mxu0
    %v500 = vpop.f32.mrb[0].mxu0
    %v501 = vadd.f32 0.0, %v500
    %v502 = vpop.f32.mrb[0].mxu0
    %503 = vdwg.mxu0
    %v504 = vadd.f32 %v457, %v498
    %v505 = vadd.f32 %v460, %v501
    %v506 = vpack.c.bf16 %v505, %v504
    %v508 = vsel %vm140, %v506, 0
    %510 = vmatprep.subr.bf16.mxu0 0
    %511 = vmatpush1.bf16.msra.mxu0 %v241
    %512 = vmatprep.subr.bf16.mxu0 0
    %513 = vmatpush1.bf16.msra.mxu0 0
    %514 = vmatprep.subr.bf16.mxu0 0
    %515 = vmatpush1.bf16.msra.mxu0 0
    %516 = vmatprep.subr.bf16.mxu0 0
    %517 = vmatpush1.bf16.msra.mxu0 0
    %518 = vmatprep.subr.bf16.mxu0 0
    %519 = vmatpush1.bf16.msra.mxu0 0
    %520 = vmatprep.subr.bf16.mxu0 0
    %521 = vmatpush1.bf16.msra.mxu0 0
    %522 = vmatprep.subr.bf16.mxu0 0
    %523 = vmatpush1.bf16.msra.mxu0 0
    %524 = vmatprep.subr.bf16.mxu0 0
    %525 = vmatpush1.bf16.msra.mxu0 0
    %526 = vmatprep.subr.bf16.mxu0 0
    %527 = vmatpush1.bf16.msra.mxu0 0
    %528 = vmatprep.subr.bf16.mxu0 0
    %529 = vmatpush1.bf16.msra.mxu0 0
    %530 = vmatprep.subr.bf16.mxu0 0
    %531 = vmatpush1.bf16.msra.mxu0 0
    %532 = vmatprep.subr.bf16.mxu0 0
    %533 = vmatpush1.bf16.msra.mxu0 0
    %534 = vmatprep.subr.bf16.mxu0 0
    %535 = vmatpush1.bf16.msra.mxu0 0
    %536 = vmatprep.subr.bf16.mxu0 0
    %537 = vmatpush1.bf16.msra.mxu0 0
    %538 = vmatprep.subr.bf16.mxu0 0
    %539 = vmatpush1.bf16.msra.mxu0 0
    %540 = vmatprep.subr.bf16.mxu0 0
    %541 = vmatpush1.bf16.msra.mxu0 0
    %542 = vmatprep.mubr.bf16.mxu0 0
    %543 = vmatmul.mubr.bf16.gmra.mrb[0].mxu0 %v508
    %v544 = vpop.f32.mrb[0].mxu0
    %v545 = vadd.f32 0.0, %v544
    %v546 = vpop.f32.mrb[0].mxu0
    %v547 = vpop.f32.mrb[0].mxu0
    %v548 = vadd.f32 0.0, %v547
    %v549 = vpop.f32.mrb[0].mxu0
    %550 = vdwg.mxu0
    %v551 = vpack.c.bf16 %v501, %v498
    %v553 = vsel %vm140, %v551, 0
    %555 = vmatprep.subr.bf16.mxu0 0
    %556 = vmatpush1.bf16.msra.mxu0 %v292
    %557 = vmatprep.subr.bf16.mxu0 0
    %558 = vmatpush1.bf16.msra.mxu0 0
    %559 = vmatprep.subr.bf16.mxu0 0
    %560 = vmatpush1.bf16.msra.mxu0 0
    %561 = vmatprep.subr.bf16.mxu0 0
    %562 = vmatpush1.bf16.msra.mxu0 0
    %563 = vmatprep.subr.bf16.mxu0 0
    %564 = vmatpush1.bf16.msra.mxu0 0
    %565 = vmatprep.subr.bf16.mxu0 0
    %566 = vmatpush1.bf16.msra.mxu0 0
    %567 = vmatprep.subr.bf16.mxu0 0
    %568 = vmatpush1.bf16.msra.mxu0 0
    %569 = vmatprep.subr.bf16.mxu0 0
    %570 = vmatpush1.bf16.msra.mxu0 0
    %571 = vmatprep.subr.bf16.mxu0 0
    %572 = vmatpush1.bf16.msra.mxu0 0
    %573 = vmatprep.subr.bf16.mxu0 0
    %574 = vmatpush1.bf16.msra.mxu0 0
    %575 = vmatprep.subr.bf16.mxu0 0
    %576 = vmatpush1.bf16.msra.mxu0 0
    %577 = vmatprep.subr.bf16.mxu0 0
    %578 = vmatpush1.bf16.msra.mxu0 0
    %579 = vmatprep.subr.bf16.mxu0 0
    %580 = vmatpush1.bf16.msra.mxu0 0
    %581 = vmatprep.subr.bf16.mxu0 0
    %582 = vmatpush1.bf16.msra.mxu0 0
    %583 = vmatprep.subr.bf16.mxu0 0
    %584 = vmatpush1.bf16.msra.mxu0 0
    %585 = vmatprep.subr.bf16.mxu0 0
    %586 = vmatpush1.bf16.msra.mxu0 0
    %587 = vmatprep.mubr.bf16.mxu0 0
    %588 = vmatmul.mubr.bf16.gmra.mrb[0].mxu0 %v553
    %v589 = vpop.f32.mrb[0].mxu0
    %v590 = vadd.f32 0.0, %v589
    %v591 = vpop.f32.mrb[0].mxu0
    %v592 = vpop.f32.mrb[0].mxu0
    %v593 = vadd.f32 0.0, %v592
    %v594 = vpop.f32.mrb[0].mxu0
    %595 = vdwg.mxu0
    %v596 = vpack.c.bf16 %v460, %v457
    %v598 = vsel %vm140, %v596, 0
    %600 = vmatprep.subr.bf16.mxu0 0
    %601 = vmatpush1.bf16.msra.mxu0 %v343
    %602 = vmatprep.subr.bf16.mxu0 0
    %603 = vmatpush1.bf16.msra.mxu0 0
    %604 = vmatprep.subr.bf16.mxu0 0
    %605 = vmatpush1.bf16.msra.mxu0 0
    %606 = vmatprep.subr.bf16.mxu0 0
    %607 = vmatpush1.bf16.msra.mxu0 0
    %608 = vmatprep.subr.bf16.mxu0 0
    %609 = vmatpush1.bf16.msra.mxu0 0
    %610 = vmatprep.subr.bf16.mxu0 0
    %611 = vmatpush1.bf16.msra.mxu0 0
    %612 = vmatprep.subr.bf16.mxu0 0
    %613 = vmatpush1.bf16.msra.mxu0 0
    %614 = vmatprep.subr.bf16.mxu0 0
    %615 = vmatpush1.bf16.msra.mxu0 0
    %616 = vmatprep.subr.bf16.mxu0 0
    %617 = vmatpush1.bf16.msra.mxu0 0
    %618 = vmatprep.subr.bf16.mxu0 0
    %619 = vmatpush1.bf16.msra.mxu0 0
    %620 = vmatprep.subr.bf16.mxu0 0
    %621 = vmatpush1.bf16.msra.mxu0 0
    %622 = vmatprep.subr.bf16.mxu0 0
    %623 = vmatpush1.bf16.msra.mxu0 0
    %624 = vmatprep.subr.bf16.mxu0 0
    %625 = vmatpush1.bf16.msra.mxu0 0
    %626 = vmatprep.subr.bf16.mxu0 0
    %627 = vmatpush1.bf16.msra.mxu0 0
    %628 = vmatprep.subr.bf16.mxu0 0
    %629 = vmatpush1.bf16.msra.mxu0 0
    %630 = vmatprep.subr.bf16.mxu0 0
    %631 = vmatpush1.bf16.msra.mxu0 0
    %632 = vmatprep.mubr.bf16.mxu0 0
    %633 = vmatmul.mubr.bf16.gmra.mrb[0].mxu0 %v598
    %v634 = vpop.f32.mrb[0].mxu0
    %v635 = vadd.f32 0.0, %v634
    %v636 = vpop.f32.mrb[0].mxu0
    %v637 = vpop.f32.mrb[0].mxu0
    %v638 = vadd.f32 0.0, %v637
    %v639 = vpop.f32.mrb[0].mxu0
    %640 = vdwg.mxu0
    %v641 = vsub.f32 %v545, %v590
    %v642 = vsub.f32 %v548, %v593
    %v643 = vadd.f32 %v545, %v635
    %v644 = vadd.f32 %v548, %v638
    %v645 = vmul.f32 %v641, %v641
    %v646 = vmul.f32 %v642, %v642
    %v647 = vmul.f32 %v643, %v643
    %v648 = vmul.f32 %v644, %v644
    %v649 = vadd.f32 %v645, %v647
    %v650 = vadd.f32 %v646, %v648
    %v651 = vrsqrt.pop %v649
    %v652 = vmul.f32 %v649, %v651
    %vm653 = vcmp.eq.f32.partialorder %v649, inf
    %v654 = vsel %vm653, %v649, %v652
    %vm655 = vcmp.eq.f32.partialorder %v649, 0.0
    %v656 = vand.u32 %v649, 2147483648
    %v657 = vsel %vm655, %v656, %v654
    %v658 = vrsqrt.pop %v650
    %v659 = vmul.f32 %v650, %v658
    %vm660 = vcmp.eq.f32.partialorder %v650, inf
    %v661 = vsel %vm660, %v650, %v659
    %vm662 = vcmp.eq.f32.partialorder %v650, 0.0
    %v663 = vand.u32 %v650, 2147483648
    %v664 = vsel %vm662, %v663, %v661
    %v665 = vadd.f32 %v405, %v657
    %v666 = vadd.f32 %v412, %v664
    %s667 = scalar_lea.vmem [#allocation11], 32
    %v668 = vld [vmem:[%s667] sm:$0xff]
    %v669 = vld [vmem:[%s667 + $0x8] sm:$0xff]
    %s670 = scalar_lea.vmem [#allocation12], 32
    %v671 = vld [vmem:[%s670] sm:$0xff]
    %v672 = vld [vmem:[%s670 + $0x8] sm:$0xff]
    %v673 = vsub.f32 %v668, %v671
    %v674 = vsub.f32 %v669, %v672
    %v675 = vpack.c.bf16 %v674, %v673
    %676 = vmatprep.subr.bf16.mxu0 0
    %677 = vmatpush1.bf16.msra.mxu0 %v675
    %678 = vmatprep.subr.bf16.mxu0 0
    %679 = vmatpush1.bf16.msra.mxu0 0
    %680 = vmatprep.subr.bf16.mxu0 0
    %681 = vmatpush1.bf16.msra.mxu0 0
    %682 = vmatprep.subr.bf16.mxu0 0
    %683 = vmatpush1.bf16.msra.mxu0 0
    %684 = vmatprep.subr.bf16.mxu0 0
    %685 = vmatpush1.bf16.msra.mxu0 0
    %686 = vmatprep.subr.bf16.mxu0 0
    %687 = vmatpush1.bf16.msra.mxu0 0
    %688 = vmatprep.subr.bf16.mxu0 0
    %689 = vmatpush1.bf16.msra.mxu0 0
    %690 = vmatprep.subr.bf16.mxu0 0
    %691 = vmatpush1.bf16.msra.mxu0 0
    %692 = vmatprep.subr.bf16.mxu0 0
    %693 = vmatpush1.bf16.msra.mxu0 0
    %694 = vmatprep.subr.bf16.mxu0 0
    %695 = vmatpush1.bf16.msra.mxu0 0
    %696 = vmatprep.subr.bf16.mxu0 0
    %697 = vmatpush1.bf16.msra.mxu0 0
    %698 = vmatprep.subr.bf16.mxu0 0
    %699 = vmatpush1.bf16.msra.mxu0 0
    %700 = vmatprep.subr.bf16.mxu0 0
    %701 = vmatpush1.bf16.msra.mxu0 0
    %702 = vmatprep.subr.bf16.mxu0 0
    %703 = vmatpush1.bf16.msra.mxu0 0
    %704 = vmatprep.subr.bf16.mxu0 0
    %705 = vmatpush1.bf16.msra.mxu0 0
    %706 = vmatprep.subr.bf16.mxu0 0
    %707 = vmatpush1.bf16.msra.mxu0 0
    %708 = vmatprep.mubr.bf16.mxu0 0
    %709 = vmatmul.mubr.bf16.gmra.mrb[0].mxu0 %v142
    %v710 = vpop.f32.mrb[0].mxu0
    %v711 = vadd.f32 0.0, %v710
    %v712 = vpop.f32.mrb[0].mxu0
    %v713 = vpop.f32.mrb[0].mxu0
    %v714 = vadd.f32 0.0, %v713
    %v715 = vpop.f32.mrb[0].mxu0
    %716 = vdwg.mxu0
    %717 = vmatprep.subr.bf16.mxu0 0
    %718 = vmatpush1.bf16.msra.mxu0 %v675
    %719 = vmatprep.subr.bf16.mxu0 0
    %720 = vmatpush1.bf16.msra.mxu0 0
    %721 = vmatprep.subr.bf16.mxu0 0
    %722 = vmatpush1.bf16.msra.mxu0 0
    %723 = vmatprep.subr.bf16.mxu0 0
    %724 = vmatpush1.bf16.msra.mxu0 0
    %725 = vmatprep.subr.bf16.mxu0 0
    %726 = vmatpush1.bf16.msra.mxu0 0
    %727 = vmatprep.subr.bf16.mxu0 0
    %728 = vmatpush1.bf16.msra.mxu0 0
    %729 = vmatprep.subr.bf16.mxu0 0
    %730 = vmatpush1.bf16.msra.mxu0 0
    %731 = vmatprep.subr.bf16.mxu0 0
    %732 = vmatpush1.bf16.msra.mxu0 0
    %733 = vmatprep.subr.bf16.mxu0 0
    %734 = vmatpush1.bf16.msra.mxu0 0
    %735 = vmatprep.subr.bf16.mxu0 0
    %736 = vmatpush1.bf16.msra.mxu0 0
    %737 = vmatprep.subr.bf16.mxu0 0
    %738 = vmatpush1.bf16.msra.mxu0 0
    %739 = vmatprep.subr.bf16.mxu0 0
    %740 = vmatpush1.bf16.msra.mxu0 0
    %741 = vmatprep.subr.bf16.mxu0 0
    %742 = vmatpush1.bf16.msra.mxu0 0
    %743 = vmatprep.subr.bf16.mxu0 0
    %744 = vmatpush1.bf16.msra.mxu0 0
    %745 = vmatprep.subr.bf16.mxu0 0
    %746 = vmatpush1.bf16.msra.mxu0 0
    %747 = vmatprep.subr.bf16.mxu0 0
    %748 = vmatpush1.bf16.msra.mxu0 0
    %749 = vmatprep.mubr.bf16.mxu0 0
    %750 = vmatmul.mubr.bf16.gmra.mrb[0].mxu0 %v191
    %v751 = vpop.f32.mrb[0].mxu0
    %v752 = vadd.f32 0.0, %v751
    %v753 = vpop.f32.mrb[0].mxu0
    %v754 = vpop.f32.mrb[0].mxu0
    %v755 = vadd.f32 0.0, %v754
    %v756 = vpop.f32.mrb[0].mxu0
    %757 = vdwg.mxu0
    %v758 = vadd.f32 %v711, %v752
    %v759 = vadd.f32 %v714, %v755
    %v760 = vpack.c.bf16 %v759, %v758
    %v762 = vsel %vm140, %v760, 0
    %764 = vmatprep.subr.bf16.mxu0 0
    %765 = vmatpush1.bf16.msra.mxu0 %v241
    %766 = vmatprep.subr.bf16.mxu0 0
    %767 = vmatpush1.bf16.msra.mxu0 0
    %768 = vmatprep.subr.bf16.mxu0 0
    %769 = vmatpush1.bf16.msra.mxu0 0
    %770 = vmatprep.subr.bf16.mxu0 0
    %771 = vmatpush1.bf16.msra.mxu0 0
    %772 = vmatprep.subr.bf16.mxu0 0
    %773 = vmatpush1.bf16.msra.mxu0 0
    %774 = vmatprep.subr.bf16.mxu0 0
    %775 = vmatpush1.bf16.msra.mxu0 0
    %776 = vmatprep.subr.bf16.mxu0 0
    %777 = vmatpush1.bf16.msra.mxu0 0
    %778 = vmatprep.subr.bf16.mxu0 0
    %779 = vmatpush1.bf16.msra.mxu0 0
    %780 = vmatprep.subr.bf16.mxu0 0
    %781 = vmatpush1.bf16.msra.mxu0 0
    %782 = vmatprep.subr.bf16.mxu0 0
    %783 = vmatpush1.bf16.msra.mxu0 0
    %784 = vmatprep.subr.bf16.mxu0 0
    %785 = vmatpush1.bf16.msra.mxu0 0
    %786 = vmatprep.subr.bf16.mxu0 0
    %787 = vmatpush1.bf16.msra.mxu0 0
    %788 = vmatprep.subr.bf16.mxu0 0
    %789 = vmatpush1.bf16.msra.mxu0 0
    %790 = vmatprep.subr.bf16.mxu0 0
    %791 = vmatpush1.bf16.msra.mxu0 0
    %792 = vmatprep.subr.bf16.mxu0 0
    %793 = vmatpush1.bf16.msra.mxu0 0
    %794 = vmatprep.subr.bf16.mxu0 0
    %795 = vmatpush1.bf16.msra.mxu0 0
    %796 = vmatprep.mubr.bf16.mxu0 0
    %797 = vmatmul.mubr.bf16.gmra.mrb[0].mxu0 %v762
    %v798 = vpop.f32.mrb[0].mxu0
    %v799 = vadd.f32 0.0, %v798
    %v800 = vpop.f32.mrb[0].mxu0
    %v801 = vpop.f32.mrb[0].mxu0
    %v802 = vadd.f32 0.0, %v801
    %v803 = vpop.f32.mrb[0].mxu0
    %804 = vdwg.mxu0
    %v805 = vpack.c.bf16 %v755, %v752
    %v807 = vsel %vm140, %v805, 0
    %809 = vmatprep.subr.bf16.mxu0 0
    %810 = vmatpush1.bf16.msra.mxu0 %v292
    %811 = vmatprep.subr.bf16.mxu0 0
    %812 = vmatpush1.bf16.msra.mxu0 0
    %813 = vmatprep.subr.bf16.mxu0 0
    %814 = vmatpush1.bf16.msra.mxu0 0
    %815 = vmatprep.subr.bf16.mxu0 0
    %816 = vmatpush1.bf16.msra.mxu0 0
    %817 = vmatprep.subr.bf16.mxu0 0
    %818 = vmatpush1.bf16.msra.mxu0 0
    %819 = vmatprep.subr.bf16.mxu0 0
    %820 = vmatpush1.bf16.msra.mxu0 0
    %821 = vmatprep.subr.bf16.mxu0 0
    %822 = vmatpush1.bf16.msra.mxu0 0
    %823 = vmatprep.subr.bf16.mxu0 0
    %824 = vmatpush1.bf16.msra.mxu0 0
    %825 = vmatprep.subr.bf16.mxu0 0
    %826 = vmatpush1.bf16.msra.mxu0 0
    %827 = vmatprep.subr.bf16.mxu0 0
    %828 = vmatpush1.bf16.msra.mxu0 0
    %829 = vmatprep.subr.bf16.mxu0 0
    %830 = vmatpush1.bf16.msra.mxu0 0
    %831 = vmatprep.subr.bf16.mxu0 0
    %832 = vmatpush1.bf16.msra.mxu0 0
    %833 = vmatprep.subr.bf16.mxu0 0
    %834 = vmatpush1.bf16.msra.mxu0 0
    %835 = vmatprep.subr.bf16.mxu0 0
    %836 = vmatpush1.bf16.msra.mxu0 0
    %837 = vmatprep.subr.bf16.mxu0 0
    %838 = vmatpush1.bf16.msra.mxu0 0
    %839 = vmatprep.subr.bf16.mxu0 0
    %840 = vmatpush1.bf16.msra.mxu0 0
    %841 = vmatprep.mubr.bf16.mxu0 0
    %842 = vmatmul.mubr.bf16.gmra.mrb[0].mxu0 %v807
    %v843 = vpop.f32.mrb[0].mxu0
    %v844 = vadd.f32 0.0, %v843
    %v845 = vpop.f32.mrb[0].mxu0
    %v846 = vpop.f32.mrb[0].mxu0
    %v847 = vadd.f32 0.0, %v846
    %v848 = vpop.f32.mrb[0].mxu0
    %849 = vdwg.mxu0
    %v850 = vpack.c.bf16 %v714, %v711
    %v852 = vsel %vm140, %v850, 0
    %854 = vmatprep.subr.bf16.mxu0 0
    %855 = vmatpush1.bf16.msra.mxu0 %v343
    %856 = vmatprep.subr.bf16.mxu0 0
    %857 = vmatpush1.bf16.msra.mxu0 0
    %858 = vmatprep.subr.bf16.mxu0 0
    %859 = vmatpush1.bf16.msra.mxu0 0
    %860 = vmatprep.subr.bf16.mxu0 0
    %861 = vmatpush1.bf16.msra.mxu0 0
    %862 = vmatprep.subr.bf16.mxu0 0
    %863 = vmatpush1.bf16.msra.mxu0 0
    %864 = vmatprep.subr.bf16.mxu0 0
    %865 = vmatpush1.bf16.msra.mxu0 0
    %866 = vmatprep.subr.bf16.mxu0 0
    %867 = vmatpush1.bf16.msra.mxu0 0
    %868 = vmatprep.subr.bf16.mxu0 0
    %869 = vmatpush1.bf16.msra.mxu0 0
    %870 = vmatprep.subr.bf16.mxu0 0
    %871 = vmatpush1.bf16.msra.mxu0 0
    %872 = vmatprep.subr.bf16.mxu0 0
    %873 = vmatpush1.bf16.msra.mxu0 0
    %874 = vmatprep.subr.bf16.mxu0 0
    %875 = vmatpush1.bf16.msra.mxu0 0
    %876 = vmatprep.subr.bf16.mxu0 0
    %877 = vmatpush1.bf16.msra.mxu0 0
    %878 = vmatprep.subr.bf16.mxu0 0
    %879 = vmatpush1.bf16.msra.mxu0 0
    %880 = vmatprep.subr.bf16.mxu0 0
    %881 = vmatpush1.bf16.msra.mxu0 0
    %882 = vmatprep.subr.bf16.mxu0 0
    %883 = vmatpush1.bf16.msra.mxu0 0
    %884 = vmatprep.subr.bf16.mxu0 0
    %885 = vmatpush1.bf16.msra.mxu0 0
    %886 = vmatprep.mubr.bf16.mxu0 0
    %887 = vmatmul.mubr.bf16.gmra.mrb[0].mxu0 %v852
    %v888 = vpop.f32.mrb[0].mxu0
    %v889 = vadd.f32 0.0, %v888
    %v890 = vpop.f32.mrb[0].mxu0
    %v891 = vpop.f32.mrb[0].mxu0
    %v892 = vadd.f32 0.0, %v891
    %v893 = vpop.f32.mrb[0].mxu0
    %894 = vdwg.mxu0
    %v895 = vsub.f32 %v799, %v844
    %v896 = vsub.f32 %v802, %v847
    %v897 = vadd.f32 %v799, %v889
    %v898 = vadd.f32 %v802, %v892
    %v899 = vmul.f32 %v895, %v895
    %v900 = vmul.f32 %v896, %v896
    %v901 = vmul.f32 %v897, %v897
    %v902 = vmul.f32 %v898, %v898
    %v903 = vadd.f32 %v899, %v901
    %v904 = vadd.f32 %v900, %v902
    %v905 = vrsqrt.pop %v903
    %v906 = vmul.f32 %v903, %v905
    %vm907 = vcmp.eq.f32.partialorder %v903, inf
    %v908 = vsel %vm907, %v903, %v906
    %vm909 = vcmp.eq.f32.partialorder %v903, 0.0
    %v910 = vand.u32 %v903, 2147483648
    %v911 = vsel %vm909, %v910, %v908
    %v912 = vrsqrt.pop %v904
    %v913 = vmul.f32 %v904, %v912
    %vm914 = vcmp.eq.f32.partialorder %v904, inf
    %v915 = vsel %vm914, %v904, %v913
    %vm916 = vcmp.eq.f32.partialorder %v904, 0.0
    %v917 = vand.u32 %v904, 2147483648
    %v918 = vsel %vm916, %v917, %v915
    %v919 = vadd.f32 %v665, %v911
    %v920 = vadd.f32 %v666, %v918
    %s921 = scalar_lea.vmem [#allocation11], 48
    %v922 = vld [vmem:[%s921] sm:$0xff]
    %v923 = vld [vmem:[%s921 + $0x8] sm:$0xff]
    %s924 = scalar_lea.vmem [#allocation12], 48
    %v925 = vld [vmem:[%s924] sm:$0xff]
    %v926 = vld [vmem:[%s924 + $0x8] sm:$0xff]
    %v927 = vsub.f32 %v922, %v925
    %v928 = vsub.f32 %v923, %v926
    %v929 = vpack.c.bf16 %v928, %v927
    %930 = vmatprep.subr.bf16.mxu0 0
    %931 = vmatpush1.bf16.msra.mxu0 %v929
    %932 = vmatprep.subr.bf16.mxu0 0
    %933 = vmatpush1.bf16.msra.mxu0 0
    %934 = vmatprep.subr.bf16.mxu0 0
    %935 = vmatpush1.bf16.msra.mxu0 0
    %936 = vmatprep.subr.bf16.mxu0 0
    %937 = vmatpush1.bf16.msra.mxu0 0
    %938 = vmatprep.subr.bf16.mxu0 0
    %939 = vmatpush1.bf16.msra.mxu0 0
    %940 = vmatprep.subr.bf16.mxu0 0
    %941 = vmatpush1.bf16.msra.mxu0 0
    %942 = vmatprep.subr.bf16.mxu0 0
    %943 = vmatpush1.bf16.msra.mxu0 0
    %944 = vmatprep.subr.bf16.mxu0 0
    %945 = vmatpush1.bf16.msra.mxu0 0
    %946 = vmatprep.subr.bf16.mxu0 0
    %947 = vmatpush1.bf16.msra.mxu0 0
    %948 = vmatprep.subr.bf16.mxu0 0
    %949 = vmatpush1.bf16.msra.mxu0 0
    %950 = vmatprep.subr.bf16.mxu0 0
    %951 = vmatpush1.bf16.msra.mxu0 0
    %952 = vmatprep.subr.bf16.mxu0 0
    %953 = vmatpush1.bf16.msra.mxu0 0
    %954 = vmatprep.subr.bf16.mxu0 0
    %955 = vmatpush1.bf16.msra.mxu0 0
    %956 = vmatprep.subr.bf16.mxu0 0
    %957 = vmatpush1.bf16.msra.mxu0 0
    %958 = vmatprep.subr.bf16.mxu0 0
    %959 = vmatpush1.bf16.msra.mxu0 0
    %960 = vmatprep.subr.bf16.mxu0 0
    %961 = vmatpush1.bf16.msra.mxu0 0
    %962 = vmatprep.mubr.bf16.mxu0 0
    %963 = vmatmul.mubr.bf16.gmra.mrb[0].mxu0 %v142
    %v964 = vpop.f32.mrb[0].mxu0
    %v965 = vadd.f32 0.0, %v964
    %v966 = vpop.f32.mrb[0].mxu0
    %v967 = vpop.f32.mrb[0].mxu0
    %v968 = vadd.f32 0.0, %v967
    %v969 = vpop.f32.mrb[0].mxu0
    %970 = vdwg.mxu0
    %971 = vmatprep.subr.bf16.mxu0 0
    %972 = vmatpush1.bf16.msra.mxu0 %v929
    %973 = vmatprep.subr.bf16.mxu0 0
    %974 = vmatpush1.bf16.msra.mxu0 0
    %975 = vmatprep.subr.bf16.mxu0 0
    %976 = vmatpush1.bf16.msra.mxu0 0
    %977 = vmatprep.subr.bf16.mxu0 0
    %978 = vmatpush1.bf16.msra.mxu0 0
    %979 = vmatprep.subr.bf16.mxu0 0
    %980 = vmatpush1.bf16.msra.mxu0 0
    %981 = vmatprep.subr.bf16.mxu0 0
    %982 = vmatpush1.bf16.msra.mxu0 0
    %983 = vmatprep.subr.bf16.mxu0 0
    %984 = vmatpush1.bf16.msra.mxu0 0
    %985 = vmatprep.subr.bf16.mxu0 0
    %986 = vmatpush1.bf16.msra.mxu0 0
    %987 = vmatprep.subr.bf16.mxu0 0
    %988 = vmatpush1.bf16.msra.mxu0 0
    %989 = vmatprep.subr.bf16.mxu0 0
    %990 = vmatpush1.bf16.msra.mxu0 0
    %991 = vmatprep.subr.bf16.mxu0 0
    %992 = vmatpush1.bf16.msra.mxu0 0
    %993 = vmatprep.subr.bf16.mxu0 0
    %994 = vmatpush1.bf16.msra.mxu0 0
    %995 = vmatprep.subr.bf16.mxu0 0
    %996 = vmatpush1.bf16.msra.mxu0 0
    %997 = vmatprep.subr.bf16.mxu0 0
    %998 = vmatpush1.bf16.msra.mxu0 0
    %999 = vmatprep.subr.bf16.mxu0 0
    %1000 = vmatpush1.bf16.msra.mxu0 0
    %1001 = vmatprep.subr.bf16.mxu0 0
    %1002 = vmatpush1.bf16.msra.mxu0 0
    %1003 = vmatprep.mubr.bf16.mxu0 0
    %1004 = vmatmul.mubr.bf16.gmra.mrb[0].mxu0 %v191
    %v1005 = vpop.f32.mrb[0].mxu0
    %v1006 = vadd.f32 0.0, %v1005
    %v1007 = vpop.f32.mrb[0].mxu0
    %v1008 = vpop.f32.mrb[0].mxu0
    %v1009 = vadd.f32 0.0, %v1008
    %v1010 = vpop.f32.mrb[0].mxu0
    %1011 = vdwg.mxu0
    %v1012 = vadd.f32 %v965, %v1006
    %v1013 = vadd.f32 %v968, %v1009
    %v1014 = vpack.c.bf16 %v1013, %v1012
    %v1016 = vsel %vm140, %v1014, 0
    %1018 = vmatprep.subr.bf16.mxu0 0
    %1019 = vmatpush1.bf16.msra.mxu0 %v241
    %1020 = vmatprep.subr.bf16.mxu0 0
    %1021 = vmatpush1.bf16.msra.mxu0 0
    %1022 = vmatprep.subr.bf16.mxu0 0
    %1023 = vmatpush1.bf16.msra.mxu0 0
    %1024 = vmatprep.subr.bf16.mxu0 0
    %1025 = vmatpush1.bf16.msra.mxu0 0
    %1026 = vmatprep.subr.bf16.mxu0 0
    %1027 = vmatpush1.bf16.msra.mxu0 0
    %1028 = vmatprep.subr.bf16.mxu0 0
    %1029 = vmatpush1.bf16.msra.mxu0 0
    %1030 = vmatprep.subr.bf16.mxu0 0
    %1031 = vmatpush1.bf16.msra.mxu0 0
    %1032 = vmatprep.subr.bf16.mxu0 0
    %1033 = vmatpush1.bf16.msra.mxu0 0
    %1034 = vmatprep.subr.bf16.mxu0 0
    %1035 = vmatpush1.bf16.msra.mxu0 0
    %1036 = vmatprep.subr.bf16.mxu0 0
    %1037 = vmatpush1.bf16.msra.mxu0 0
    %1038 = vmatprep.subr.bf16.mxu0 0
    %1039 = vmatpush1.bf16.msra.mxu0 0
    %1040 = vmatprep.subr.bf16.mxu0 0
    %1041 = vmatpush1.bf16.msra.mxu0 0
    %1042 = vmatprep.subr.bf16.mxu0 0
    %1043 = vmatpush1.bf16.msra.mxu0 0
    %1044 = vmatprep.subr.bf16.mxu0 0
    %1045 = vmatpush1.bf16.msra.mxu0 0
    %1046 = vmatprep.subr.bf16.mxu0 0
    %1047 = vmatpush1.bf16.msra.mxu0 0
    %1048 = vmatprep.subr.bf16.mxu0 0
    %1049 = vmatpush1.bf16.msra.mxu0 0
    %1050 = vmatprep.mubr.bf16.mxu0 0
    %1051 = vmatmul.mubr.bf16.gmra.mrb[0].mxu0 %v1016
    %v1052 = vpop.f32.mrb[0].mxu0
    %v1053 = vadd.f32 0.0, %v1052
    %v1054 = vpop.f32.mrb[0].mxu0
    %v1055 = vpop.f32.mrb[0].mxu0
    %v1056 = vadd.f32 0.0, %v1055
    %v1057 = vpop.f32.mrb[0].mxu0
    %1058 = vdwg.mxu0
    %v1059 = vpack.c.bf16 %v1009, %v1006
    %v1061 = vsel %vm140, %v1059, 0
    %1063 = vmatprep.subr.bf16.mxu0 0
    %1064 = vmatpush1.bf16.msra.mxu0 %v292
    %1065 = vmatprep.subr.bf16.mxu0 0
    %1066 = vmatpush1.bf16.msra.mxu0 0
    %1067 = vmatprep.subr.bf16.mxu0 0
    %1068 = vmatpush1.bf16.msra.mxu0 0
    %1069 = vmatprep.subr.bf16.mxu0 0
    %1070 = vmatpush1.bf16.msra.mxu0 0
    %1071 = vmatprep.subr.bf16.mxu0 0
    %1072 = vmatpush1.bf16.msra.mxu0 0
    %1073 = vmatprep.subr.bf16.mxu0 0
    %1074 = vmatpush1.bf16.msra.mxu0 0
    %1075 = vmatprep.subr.bf16.mxu0 0
    %1076 = vmatpush1.bf16.msra.mxu0 0
    %1077 = vmatprep.subr.bf16.mxu0 0
    %1078 = vmatpush1.bf16.msra.mxu0 0
    %1079 = vmatprep.subr.bf16.mxu0 0
    %1080 = vmatpush1.bf16.msra.mxu0 0
    %1081 = vmatprep.subr.bf16.mxu0 0
    %1082 = vmatpush1.bf16.msra.mxu0 0
    %1083 = vmatprep.subr.bf16.mxu0 0
    %1084 = vmatpush1.bf16.msra.mxu0 0
    %1085 = vmatprep.subr.bf16.mxu0 0
    %1086 = vmatpush1.bf16.msra.mxu0 0
    %1087 = vmatprep.subr.bf16.mxu0 0
    %1088 = vmatpush1.bf16.msra.mxu0 0
    %1089 = vmatprep.subr.bf16.mxu0 0
    %1090 = vmatpush1.bf16.msra.mxu0 0
    %1091 = vmatprep.subr.bf16.mxu0 0
    %1092 = vmatpush1.bf16.msra.mxu0 0
    %1093 = vmatprep.subr.bf16.mxu0 0
    %1094 = vmatpush1.bf16.msra.mxu0 0
    %1095 = vmatprep.mubr.bf16.mxu0 0
    %1096 = vmatmul.mubr.bf16.gmra.mrb[0].mxu0 %v1061
    %v1097 = vpop.f32.mrb[0].mxu0
    %v1098 = vadd.f32 0.0, %v1097
    %v1099 = vpop.f32.mrb[0].mxu0
    %v1100 = vpop.f32.mrb[0].mxu0
    %v1101 = vadd.f32 0.0, %v1100
    %v1102 = vpop.f32.mrb[0].mxu0
    %1103 = vdwg.mxu0
    %v1104 = vpack.c.bf16 %v968, %v965
    %v1106 = vsel %vm140, %v1104, 0
    %1108 = vmatprep.subr.bf16.mxu0 0
    %1109 = vmatpush1.bf16.msra.mxu0 %v343
    %1110 = vmatprep.subr.bf16.mxu0 0
    %1111 = vmatpush1.bf16.msra.mxu0 0
    %1112 = vmatprep.subr.bf16.mxu0 0
    %1113 = vmatpush1.bf16.msra.mxu0 0
    %1114 = vmatprep.subr.bf16.mxu0 0
    %1115 = vmatpush1.bf16.msra.mxu0 0
    %1116 = vmatprep.subr.bf16.mxu0 0
    %1117 = vmatpush1.bf16.msra.mxu0 0
    %1118 = vmatprep.subr.bf16.mxu0 0
    %1119 = vmatpush1.bf16.msra.mxu0 0
    %1120 = vmatprep.subr.bf16.mxu0 0
    %1121 = vmatpush1.bf16.msra.mxu0 0
    %1122 = vmatprep.subr.bf16.mxu0 0
    %1123 = vmatpush1.bf16.msra.mxu0 0
    %1124 = vmatprep.subr.bf16.mxu0 0
    %1125 = vmatpush1.bf16.msra.mxu0 0
    %1126 = vmatprep.subr.bf16.mxu0 0
    %1127 = vmatpush1.bf16.msra.mxu0 0
    %1128 = vmatprep.subr.bf16.mxu0 0
    %1129 = vmatpush1.bf16.msra.mxu0 0
    %1130 = vmatprep.subr.bf16.mxu0 0
    %1131 = vmatpush1.bf16.msra.mxu0 0
    %1132 = vmatprep.subr.bf16.mxu0 0
    %1133 = vmatpush1.bf16.msra.mxu0 0
    %1134 = vmatprep.subr.bf16.mxu0 0
    %1135 = vmatpush1.bf16.msra.mxu0 0
    %1136 = vmatprep.subr.bf16.mxu0 0
    %1137 = vmatpush1.bf16.msra.mxu0 0
    %1138 = vmatprep.subr.bf16.mxu0 0
    %1139 = vmatpush1.bf16.msra.mxu0 0
    %1140 = vmatprep.mubr.bf16.mxu0 0
    %1141 = vmatmul.mubr.bf16.gmra.mrb[0].mxu0 %v1106
    %v1142 = vpop.f32.mrb[0].mxu0
    %v1143 = vadd.f32 0.0, %v1142
    %v1144 = vpop.f32.mrb[0].mxu0
    %v1145 = vpop.f32.mrb[0].mxu0
    %v1146 = vadd.f32 0.0, %v1145
    %v1147 = vpop.f32.mrb[0].mxu0
    %1148 = vdwg.mxu0
    %v1149 = vsub.f32 %v1053, %v1098
    %v1150 = vsub.f32 %v1056, %v1101
    %v1151 = vadd.f32 %v1053, %v1143
    %v1152 = vadd.f32 %v1056, %v1146
    %v1153 = vmul.f32 %v1149, %v1149
    %v1154 = vmul.f32 %v1150, %v1150
    %v1155 = vmul.f32 %v1151, %v1151
    %v1156 = vmul.f32 %v1152, %v1152
    %v1157 = vadd.f32 %v1153, %v1155
    %v1158 = vadd.f32 %v1154, %v1156
    %v1159 = vrsqrt.pop %v1157
    %v1160 = vmul.f32 %v1157, %v1159
    %vm1161 = vcmp.eq.f32.partialorder %v1157, inf
    %v1162 = vsel %vm1161, %v1157, %v1160
    %vm1163 = vcmp.eq.f32.partialorder %v1157, 0.0
    %v1164 = vand.u32 %v1157, 2147483648
    %v1165 = vsel %vm1163, %v1164, %v1162
    %v1166 = vrsqrt.pop %v1158
    %v1167 = vmul.f32 %v1158, %v1166
    %vm1168 = vcmp.eq.f32.partialorder %v1158, inf
    %v1169 = vsel %vm1168, %v1158, %v1167
    %vm1170 = vcmp.eq.f32.partialorder %v1158, 0.0
    %v1171 = vand.u32 %v1158, 2147483648
    %v1172 = vsel %vm1170, %v1171, %v1169
    %v1173 = vadd.f32 %v919, %v1165
    %v1174 = vadd.f32 %v920, %v1172
    %s1175 = scalar_lea.vmem [#allocation11], 64
    %v1176 = vld [vmem:[%s1175] sm:$0xff]
    %v1177 = vld [vmem:[%s1175 + $0x8] sm:$0xff]
    %s1178 = scalar_lea.vmem [#allocation12], 64
    %v1179 = vld [vmem:[%s1178] sm:$0xff]
    %v1180 = vld [vmem:[%s1178 + $0x8] sm:$0xff]
    %v1181 = vsub.f32 %v1176, %v1179
    %v1182 = vsub.f32 %v1177, %v1180
    %v1183 = vpack.c.bf16 %v1182, %v1181
    %1184 = vmatprep.subr.bf16.mxu0 0
    %1185 = vmatpush1.bf16.msra.mxu0 %v1183
    %1186 = vmatprep.subr.bf16.mxu0 0
    %1187 = vmatpush1.bf16.msra.mxu0 0
    %1188 = vmatprep.subr.bf16.mxu0 0
    %1189 = vmatpush1.bf16.msra.mxu0 0
    %1190 = vmatprep.subr.bf16.mxu0 0
    %1191 = vmatpush1.bf16.msra.mxu0 0
    %1192 = vmatprep.subr.bf16.mxu0 0
    %1193 = vmatpush1.bf16.msra.mxu0 0
    %1194 = vmatprep.subr.bf16.mxu0 0
    %1195 = vmatpush1.bf16.msra.mxu0 0
    %1196 = vmatprep.subr.bf16.mxu0 0
    %1197 = vmatpush1.bf16.msra.mxu0 0
    %1198 = vmatprep.subr.bf16.mxu0 0
    %1199 = vmatpush1.bf16.msra.mxu0 0
    %1200 = vmatprep.subr.bf16.mxu0 0
    %1201 = vmatpush1.bf16.msra.mxu0 0
    %1202 = vmatprep.subr.bf16.mxu0 0
    %1203 = vmatpush1.bf16.msra.mxu0 0
    %1204 = vmatprep.subr.bf16.mxu0 0
    %1205 = vmatpush1.bf16.msra.mxu0 0
    %1206 = vmatprep.subr.bf16.mxu0 0
    %1207 = vmatpush1.bf16.msra.mxu0 0
    %1208 = vmatprep.subr.bf16.mxu0 0
    %1209 = vmatpush1.bf16.msra.mxu0 0
    %1210 = vmatprep.subr.bf16.mxu0 0
    %1211 = vmatpush1.bf16.msra.mxu0 0
    %1212 = vmatprep.subr.bf16.mxu0 0
    %1213 = vmatpush1.bf16.msra.mxu0 0
    %1214 = vmatprep.subr.bf16.mxu0 0
    %1215 = vmatpush1.bf16.msra.mxu0 0
    %1216 = vmatprep.mubr.bf16.mxu0 0
    %1217 = vmatmul.mubr.bf16.gmra.mrb[0].mxu0 %v142
    %v1218 = vpop.f32.mrb[0].mxu0
    %v1219 = vadd.f32 0.0, %v1218
    %v1220 = vpop.f32.mrb[0].mxu0
    %v1221 = vpop.f32.mrb[0].mxu0
    %v1222 = vadd.f32 0.0, %v1221
    %v1223 = vpop.f32.mrb[0].mxu0
    %1224 = vdwg.mxu0
    %1225 = vmatprep.subr.bf16.mxu0 0
    %1226 = vmatpush1.bf16.msra.mxu0 %v1183
    %1227 = vmatprep.subr.bf16.mxu0 0
    %1228 = vmatpush1.bf16.msra.mxu0 0
    %1229 = vmatprep.subr.bf16.mxu0 0
    %1230 = vmatpush1.bf16.msra.mxu0 0
    %1231 = vmatprep.subr.bf16.mxu0 0
    %1232 = vmatpush1.bf16.msra.mxu0 0
    %1233 = vmatprep.subr.bf16.mxu0 0
    %1234 = vmatpush1.bf16.msra.mxu0 0
    %1235 = vmatprep.subr.bf16.mxu0 0
    %1236 = vmatpush1.bf16.msra.mxu0 0
    %1237 = vmatprep.subr.bf16.mxu0 0
    %1238 = vmatpush1.bf16.msra.mxu0 0
    %1239 = vmatprep.subr.bf16.mxu0 0
    %1240 = vmatpush1.bf16.msra.mxu0 0
    %1241 = vmatprep.subr.bf16.mxu0 0
    %1242 = vmatpush1.bf16.msra.mxu0 0
    %1243 = vmatprep.subr.bf16.mxu0 0
    %1244 = vmatpush1.bf16.msra.mxu0 0
    %1245 = vmatprep.subr.bf16.mxu0 0
    %1246 = vmatpush1.bf16.msra.mxu0 0
    %1247 = vmatprep.subr.bf16.mxu0 0
    %1248 = vmatpush1.bf16.msra.mxu0 0
    %1249 = vmatprep.subr.bf16.mxu0 0
    %1250 = vmatpush1.bf16.msra.mxu0 0
    %1251 = vmatprep.subr.bf16.mxu0 0
    %1252 = vmatpush1.bf16.msra.mxu0 0
    %1253 = vmatprep.subr.bf16.mxu0 0
    %1254 = vmatpush1.bf16.msra.mxu0 0
    %1255 = vmatprep.subr.bf16.mxu0 0
    %1256 = vmatpush1.bf16.msra.mxu0 0
    %1257 = vmatprep.mubr.bf16.mxu0 0
    %1258 = vmatmul.mubr.bf16.gmra.mrb[0].mxu0 %v191
    %v1259 = vpop.f32.mrb[0].mxu0
    %v1260 = vadd.f32 0.0, %v1259
    %v1261 = vpop.f32.mrb[0].mxu0
    %v1262 = vpop.f32.mrb[0].mxu0
    %v1263 = vadd.f32 0.0, %v1262
    %v1264 = vpop.f32.mrb[0].mxu0
    %1265 = vdwg.mxu0
    %v1266 = vadd.f32 %v1219, %v1260
    %v1267 = vadd.f32 %v1222, %v1263
    %v1268 = vpack.c.bf16 %v1267, %v1266
    %v1270 = vsel %vm140, %v1268, 0
    %1272 = vmatprep.subr.bf16.mxu0 0
    %1273 = vmatpush1.bf16.msra.mxu0 %v241
    %1274 = vmatprep.subr.bf16.mxu0 0
    %1275 = vmatpush1.bf16.msra.mxu0 0
    %1276 = vmatprep.subr.bf16.mxu0 0
    %1277 = vmatpush1.bf16.msra.mxu0 0
    %1278 = vmatprep.subr.bf16.mxu0 0
    %1279 = vmatpush1.bf16.msra.mxu0 0
    %1280 = vmatprep.subr.bf16.mxu0 0
    %1281 = vmatpush1.bf16.msra.mxu0 0
    %1282 = vmatprep.subr.bf16.mxu0 0
    %1283 = vmatpush1.bf16.msra.mxu0 0
    %1284 = vmatprep.subr.bf16.mxu0 0
    %1285 = vmatpush1.bf16.msra.mxu0 0
    %1286 = vmatprep.subr.bf16.mxu0 0
    %1287 = vmatpush1.bf16.msra.mxu0 0
    %1288 = vmatprep.subr.bf16.mxu0 0
    %1289 = vmatpush1.bf16.msra.mxu0 0
    %1290 = vmatprep.subr.bf16.mxu0 0
    %1291 = vmatpush1.bf16.msra.mxu0 0
    %1292 = vmatprep.subr.bf16.mxu0 0
    %1293 = vmatpush1.bf16.msra.mxu0 0
    %1294 = vmatprep.subr.bf16.mxu0 0
    %1295 = vmatpush1.bf16.msra.mxu0 0
    %1296 = vmatprep.subr.bf16.mxu0 0
    %1297 = vmatpush1.bf16.msra.mxu0 0
    %1298 = vmatprep.subr.bf16.mxu0 0
    %1299 = vmatpush1.bf16.msra.mxu0 0
    %1300 = vmatprep.subr.bf16.mxu0 0
    %1301 = vmatpush1.bf16.msra.mxu0 0
    %1302 = vmatprep.subr.bf16.mxu0 0
    %1303 = vmatpush1.bf16.msra.mxu0 0
    %1304 = vmatprep.mubr.bf16.mxu0 0
    %1305 = vmatmul.mubr.bf16.gmra.mrb[0].mxu0 %v1270
    %v1306 = vpop.f32.mrb[0].mxu0
    %v1307 = vadd.f32 0.0, %v1306
    %v1308 = vpop.f32.mrb[0].mxu0
    %v1309 = vpop.f32.mrb[0].mxu0
    %v1310 = vadd.f32 0.0, %v1309
    %v1311 = vpop.f32.mrb[0].mxu0
    %1312 = vdwg.mxu0
    %v1313 = vpack.c.bf16 %v1263, %v1260
    %v1315 = vsel %vm140, %v1313, 0
    %1317 = vmatprep.subr.bf16.mxu0 0
    %1318 = vmatpush1.bf16.msra.mxu0 %v292
    %1319 = vmatprep.subr.bf16.mxu0 0
    %1320 = vmatpush1.bf16.msra.mxu0 0
    %1321 = vmatprep.subr.bf16.mxu0 0
    %1322 = vmatpush1.bf16.msra.mxu0 0
    %1323 = vmatprep.subr.bf16.mxu0 0
    %1324 = vmatpush1.bf16.msra.mxu0 0
    %1325 = vmatprep.subr.bf16.mxu0 0
    %1326 = vmatpush1.bf16.msra.mxu0 0
    %1327 = vmatprep.subr.bf16.mxu0 0
    %1328 = vmatpush1.bf16.msra.mxu0 0
    %1329 = vmatprep.subr.bf16.mxu0 0
    %1330 = vmatpush1.bf16.msra.mxu0 0
    %1331 = vmatprep.subr.bf16.mxu0 0
    %1332 = vmatpush1.bf16.msra.mxu0 0
    %1333 = vmatprep.subr.bf16.mxu0 0
    %1334 = vmatpush1.bf16.msra.mxu0 0
    %1335 = vmatprep.subr.bf16.mxu0 0
    %1336 = vmatpush1.bf16.msra.mxu0 0
    %1337 = vmatprep.subr.bf16.mxu0 0
    %1338 = vmatpush1.bf16.msra.mxu0 0
    %1339 = vmatprep.subr.bf16.mxu0 0
    %1340 = vmatpush1.bf16.msra.mxu0 0
    %1341 = vmatprep.subr.bf16.mxu0 0
    %1342 = vmatpush1.bf16.msra.mxu0 0
    %1343 = vmatprep.subr.bf16.mxu0 0
    %1344 = vmatpush1.bf16.msra.mxu0 0
    %1345 = vmatprep.subr.bf16.mxu0 0
    %1346 = vmatpush1.bf16.msra.mxu0 0
    %1347 = vmatprep.subr.bf16.mxu0 0
    %1348 = vmatpush1.bf16.msra.mxu0 0
    %1349 = vmatprep.mubr.bf16.mxu0 0
    %1350 = vmatmul.mubr.bf16.gmra.mrb[0].mxu0 %v1315
    %v1351 = vpop.f32.mrb[0].mxu0
    %v1352 = vadd.f32 0.0, %v1351
    %v1353 = vpop.f32.mrb[0].mxu0
    %v1354 = vpop.f32.mrb[0].mxu0
    %v1355 = vadd.f32 0.0, %v1354
    %v1356 = vpop.f32.mrb[0].mxu0
    %1357 = vdwg.mxu0
    %v1358 = vpack.c.bf16 %v1222, %v1219
    %v1360 = vsel %vm140, %v1358, 0
    %1362 = vmatprep.subr.bf16.mxu0 0
    %1363 = vmatpush1.bf16.msra.mxu0 %v343
    %1364 = vmatprep.subr.bf16.mxu0 0
    %1365 = vmatpush1.bf16.msra.mxu0 0
    %1366 = vmatprep.subr.bf16.mxu0 0
    %1367 = vmatpush1.bf16.msra.mxu0 0
    %1368 = vmatprep.subr.bf16.mxu0 0
    %1369 = vmatpush1.bf16.msra.mxu0 0
    %1370 = vmatprep.subr.bf16.mxu0 0
    %1371 = vmatpush1.bf16.msra.mxu0 0
    %1372 = vmatprep.subr.bf16.mxu0 0
    %1373 = vmatpush1.bf16.msra.mxu0 0
    %1374 = vmatprep.subr.bf16.mxu0 0
    %1375 = vmatpush1.bf16.msra.mxu0 0
    %1376 = vmatprep.subr.bf16.mxu0 0
    %1377 = vmatpush1.bf16.msra.mxu0 0
    %1378 = vmatprep.subr.bf16.mxu0 0
    %1379 = vmatpush1.bf16.msra.mxu0 0
    %1380 = vmatprep.subr.bf16.mxu0 0
    %1381 = vmatpush1.bf16.msra.mxu0 0
    %1382 = vmatprep.subr.bf16.mxu0 0
    %1383 = vmatpush1.bf16.msra.mxu0 0
    %1384 = vmatprep.subr.bf16.mxu0 0
    %1385 = vmatpush1.bf16.msra.mxu0 0
    %1386 = vmatprep.subr.bf16.mxu0 0
    %1387 = vmatpush1.bf16.msra.mxu0 0
    %1388 = vmatprep.subr.bf16.mxu0 0
    %1389 = vmatpush1.bf16.msra.mxu0 0
    %1390 = vmatprep.subr.bf16.mxu0 0
    %1391 = vmatpush1.bf16.msra.mxu0 0
    %1392 = vmatprep.subr.bf16.mxu0 0
    %1393 = vmatpush1.bf16.msra.mxu0 0
    %1394 = vmatprep.mubr.bf16.mxu0 0
    %1395 = vmatmul.mubr.bf16.gmra.mrb[0].mxu0 %v1360
    %v1396 = vpop.f32.mrb[0].mxu0
    %v1397 = vadd.f32 0.0, %v1396
    %v1398 = vpop.f32.mrb[0].mxu0
    %v1399 = vpop.f32.mrb[0].mxu0
    %v1400 = vadd.f32 0.0, %v1399
    %v1401 = vpop.f32.mrb[0].mxu0
    %1402 = vdwg.mxu0
    %v1403 = vsub.f32 %v1307, %v1352
    %v1404 = vsub.f32 %v1310, %v1355
    %v1405 = vadd.f32 %v1307, %v1397
    %v1406 = vadd.f32 %v1310, %v1400
    %v1407 = vmul.f32 %v1403, %v1403
    %v1408 = vmul.f32 %v1404, %v1404
    %v1409 = vmul.f32 %v1405, %v1405
    %v1410 = vmul.f32 %v1406, %v1406
    %v1411 = vadd.f32 %v1407, %v1409
    %v1412 = vadd.f32 %v1408, %v1410
    %v1413 = vrsqrt.pop %v1411
    %v1414 = vmul.f32 %v1411, %v1413
    %vm1415 = vcmp.eq.f32.partialorder %v1411, inf
    %v1416 = vsel %vm1415, %v1411, %v1414
    %vm1417 = vcmp.eq.f32.partialorder %v1411, 0.0
    %v1418 = vand.u32 %v1411, 2147483648
    %v1419 = vsel %vm1417, %v1418, %v1416
    %v1420 = vrsqrt.pop %v1412
    %v1421 = vmul.f32 %v1412, %v1420
    %vm1422 = vcmp.eq.f32.partialorder %v1412, inf
    %v1423 = vsel %vm1422, %v1412, %v1421
    %vm1424 = vcmp.eq.f32.partialorder %v1412, 0.0
    %v1425 = vand.u32 %v1412, 2147483648
    %v1426 = vsel %vm1424, %v1425, %v1423
    %v1427 = vadd.f32 %v1173, %v1419
    %v1428 = vadd.f32 %v1174, %v1426
    %s1429 = scalar_lea.vmem [#allocation11], 80
    %v1430 = vld [vmem:[%s1429] sm:$0xff]
    %v1431 = vld [vmem:[%s1429 + $0x8] sm:$0xff]
    %s1432 = scalar_lea.vmem [#allocation12], 80
    %v1433 = vld [vmem:[%s1432] sm:$0xff]
    %v1434 = vld [vmem:[%s1432 + $0x8] sm:$0xff]
    %v1435 = vsub.f32 %v1430, %v1433
    %v1436 = vsub.f32 %v1431, %v1434
    %v1437 = vpack.c.bf16 %v1436, %v1435
    %1438 = vmatprep.subr.bf16.mxu0 0
    %1439 = vmatpush1.bf16.msra.mxu0 %v1437
    %1440 = vmatprep.subr.bf16.mxu0 0
    %1441 = vmatpush1.bf16.msra.mxu0 0
    %1442 = vmatprep.subr.bf16.mxu0 0
    %1443 = vmatpush1.bf16.msra.mxu0 0
    %1444 = vmatprep.subr.bf16.mxu0 0
    %1445 = vmatpush1.bf16.msra.mxu0 0
    %1446 = vmatprep.subr.bf16.mxu0 0
    %1447 = vmatpush1.bf16.msra.mxu0 0
    %1448 = vmatprep.subr.bf16.mxu0 0
    %1449 = vmatpush1.bf16.msra.mxu0 0
    %1450 = vmatprep.subr.bf16.mxu0 0
    %1451 = vmatpush1.bf16.msra.mxu0 0
    %1452 = vmatprep.subr.bf16.mxu0 0
    %1453 = vmatpush1.bf16.msra.mxu0 0
    %1454 = vmatprep.subr.bf16.mxu0 0
    %1455 = vmatpush1.bf16.msra.mxu0 0
    %1456 = vmatprep.subr.bf16.mxu0 0
    %1457 = vmatpush1.bf16.msra.mxu0 0
    %1458 = vmatprep.subr.bf16.mxu0 0
    %1459 = vmatpush1.bf16.msra.mxu0 0
    %1460 = vmatprep.subr.bf16.mxu0 0
    %1461 = vmatpush1.bf16.msra.mxu0 0
    %1462 = vmatprep.subr.bf16.mxu0 0
    %1463 = vmatpush1.bf16.msra.mxu0 0
    %1464 = vmatprep.subr.bf16.mxu0 0
    %1465 = vmatpush1.bf16.msra.mxu0 0
    %1466 = vmatprep.subr.bf16.mxu0 0
    %1467 = vmatpush1.bf16.msra.mxu0 0
    %1468 = vmatprep.subr.bf16.mxu0 0
    %1469 = vmatpush1.bf16.msra.mxu0 0
    %1470 = vmatprep.mubr.bf16.mxu0 0
    %1471 = vmatmul.mubr.bf16.gmra.mrb[0].mxu0 %v142
    %v1472 = vpop.f32.mrb[0].mxu0
    %v1473 = vadd.f32 0.0, %v1472
    %v1474 = vpop.f32.mrb[0].mxu0
    %v1475 = vpop.f32.mrb[0].mxu0
    %v1476 = vadd.f32 0.0, %v1475
    %v1477 = vpop.f32.mrb[0].mxu0
    %1478 = vdwg.mxu0
    %1479 = vmatprep.subr.bf16.mxu0 0
    %1480 = vmatpush1.bf16.msra.mxu0 %v1437
    %1481 = vmatprep.subr.bf16.mxu0 0
    %1482 = vmatpush1.bf16.msra.mxu0 0
    %1483 = vmatprep.subr.bf16.mxu0 0
    %1484 = vmatpush1.bf16.msra.mxu0 0
    %1485 = vmatprep.subr.bf16.mxu0 0
    %1486 = vmatpush1.bf16.msra.mxu0 0
    %1487 = vmatprep.subr.bf16.mxu0 0
    %1488 = vmatpush1.bf16.msra.mxu0 0
    %1489 = vmatprep.subr.bf16.mxu0 0
    %1490 = vmatpush1.bf16.msra.mxu0 0
    %1491 = vmatprep.subr.bf16.mxu0 0
    %1492 = vmatpush1.bf16.msra.mxu0 0
    %1493 = vmatprep.subr.bf16.mxu0 0
    %1494 = vmatpush1.bf16.msra.mxu0 0
    %1495 = vmatprep.subr.bf16.mxu0 0
    %1496 = vmatpush1.bf16.msra.mxu0 0
    %1497 = vmatprep.subr.bf16.mxu0 0
    %1498 = vmatpush1.bf16.msra.mxu0 0
    %1499 = vmatprep.subr.bf16.mxu0 0
    %1500 = vmatpush1.bf16.msra.mxu0 0
    %1501 = vmatprep.subr.bf16.mxu0 0
    %1502 = vmatpush1.bf16.msra.mxu0 0
    %1503 = vmatprep.subr.bf16.mxu0 0
    %1504 = vmatpush1.bf16.msra.mxu0 0
    %1505 = vmatprep.subr.bf16.mxu0 0
    %1506 = vmatpush1.bf16.msra.mxu0 0
    %1507 = vmatprep.subr.bf16.mxu0 0
    %1508 = vmatpush1.bf16.msra.mxu0 0
    %1509 = vmatprep.subr.bf16.mxu0 0
    %1510 = vmatpush1.bf16.msra.mxu0 0
    %1511 = vmatprep.mubr.bf16.mxu0 0
    %1512 = vmatmul.mubr.bf16.gmra.mrb[0].mxu0 %v191
    %v1513 = vpop.f32.mrb[0].mxu0
    %v1514 = vadd.f32 0.0, %v1513
    %v1515 = vpop.f32.mrb[0].mxu0
    %v1516 = vpop.f32.mrb[0].mxu0
    %v1517 = vadd.f32 0.0, %v1516
    %v1518 = vpop.f32.mrb[0].mxu0
    %1519 = vdwg.mxu0
    %v1520 = vadd.f32 %v1473, %v1514
    %v1521 = vadd.f32 %v1476, %v1517
    %v1522 = vpack.c.bf16 %v1521, %v1520
    %v1524 = vsel %vm140, %v1522, 0
    %1526 = vmatprep.subr.bf16.mxu0 0
    %1527 = vmatpush1.bf16.msra.mxu0 %v241
    %1528 = vmatprep.subr.bf16.mxu0 0
    %1529 = vmatpush1.bf16.msra.mxu0 0
    %1530 = vmatprep.subr.bf16.mxu0 0
    %1531 = vmatpush1.bf16.msra.mxu0 0
    %1532 = vmatprep.subr.bf16.mxu0 0
    %1533 = vmatpush1.bf16.msra.mxu0 0
    %1534 = vmatprep.subr.bf16.mxu0 0
    %1535 = vmatpush1.bf16.msra.mxu0 0
    %1536 = vmatprep.subr.bf16.mxu0 0
    %1537 = vmatpush1.bf16.msra.mxu0 0
    %1538 = vmatprep.subr.bf16.mxu0 0
    %1539 = vmatpush1.bf16.msra.mxu0 0
    %1540 = vmatprep.subr.bf16.mxu0 0
    %1541 = vmatpush1.bf16.msra.mxu0 0
    %1542 = vmatprep.subr.bf16.mxu0 0
    %1543 = vmatpush1.bf16.msra.mxu0 0
    %1544 = vmatprep.subr.bf16.mxu0 0
    %1545 = vmatpush1.bf16.msra.mxu0 0
    %1546 = vmatprep.subr.bf16.mxu0 0
    %1547 = vmatpush1.bf16.msra.mxu0 0
    %1548 = vmatprep.subr.bf16.mxu0 0
    %1549 = vmatpush1.bf16.msra.mxu0 0
    %1550 = vmatprep.subr.bf16.mxu0 0
    %1551 = vmatpush1.bf16.msra.mxu0 0
    %1552 = vmatprep.subr.bf16.mxu0 0
    %1553 = vmatpush1.bf16.msra.mxu0 0
    %1554 = vmatprep.subr.bf16.mxu0 0
    %1555 = vmatpush1.bf16.msra.mxu0 0
    %1556 = vmatprep.subr.bf16.mxu0 0
    %1557 = vmatpush1.bf16.msra.mxu0 0
    %1558 = vmatprep.mubr.bf16.mxu0 0
    %1559 = vmatmul.mubr.bf16.gmra.mrb[0].mxu0 %v1524
    %v1560 = vpop.f32.mrb[0].mxu0
    %v1561 = vadd.f32 0.0, %v1560
    %v1562 = vpop.f32.mrb[0].mxu0
    %v1563 = vpop.f32.mrb[0].mxu0
    %v1564 = vadd.f32 0.0, %v1563
    %v1565 = vpop.f32.mrb[0].mxu0
    %1566 = vdwg.mxu0
    %v1567 = vpack.c.bf16 %v1517, %v1514
    %v1569 = vsel %vm140, %v1567, 0
    %1571 = vmatprep.subr.bf16.mxu0 0
    %1572 = vmatpush1.bf16.msra.mxu0 %v292
    %1573 = vmatprep.subr.bf16.mxu0 0
    %1574 = vmatpush1.bf16.msra.mxu0 0
    %1575 = vmatprep.subr.bf16.mxu0 0
    %1576 = vmatpush1.bf16.msra.mxu0 0
    %1577 = vmatprep.subr.bf16.mxu0 0
    %1578 = vmatpush1.bf16.msra.mxu0 0
    %1579 = vmatprep.subr.bf16.mxu0 0
    %1580 = vmatpush1.bf16.msra.mxu0 0
    %1581 = vmatprep.subr.bf16.mxu0 0
    %1582 = vmatpush1.bf16.msra.mxu0 0
    %1583 = vmatprep.subr.bf16.mxu0 0
    %1584 = vmatpush1.bf16.msra.mxu0 0
    %1585 = vmatprep.subr.bf16.mxu0 0
    %1586 = vmatpush1.bf16.msra.mxu0 0
    %1587 = vmatprep.subr.bf16.mxu0 0
    %1588 = vmatpush1.bf16.msra.mxu0 0
    %1589 = vmatprep.subr.bf16.mxu0 0
    %1590 = vmatpush1.bf16.msra.mxu0 0
    %1591 = vmatprep.subr.bf16.mxu0 0
    %1592 = vmatpush1.bf16.msra.mxu0 0
    %1593 = vmatprep.subr.bf16.mxu0 0
    %1594 = vmatpush1.bf16.msra.mxu0 0
    %1595 = vmatprep.subr.bf16.mxu0 0
    %1596 = vmatpush1.bf16.msra.mxu0 0
    %1597 = vmatprep.subr.bf16.mxu0 0
    %1598 = vmatpush1.bf16.msra.mxu0 0
    %1599 = vmatprep.subr.bf16.mxu0 0
    %1600 = vmatpush1.bf16.msra.mxu0 0
    %1601 = vmatprep.subr.bf16.mxu0 0
    %1602 = vmatpush1.bf16.msra.mxu0 0
    %1603 = vmatprep.mubr.bf16.mxu0 0
    %1604 = vmatmul.mubr.bf16.gmra.mrb[0].mxu0 %v1569
    %v1605 = vpop.f32.mrb[0].mxu0
    %v1606 = vadd.f32 0.0, %v1605
    %v1607 = vpop.f32.mrb[0].mxu0
    %v1608 = vpop.f32.mrb[0].mxu0
    %v1609 = vadd.f32 0.0, %v1608
    %v1610 = vpop.f32.mrb[0].mxu0
    %1611 = vdwg.mxu0
    %v1612 = vpack.c.bf16 %v1476, %v1473
    %v1614 = vsel %vm140, %v1612, 0
    %1616 = vmatprep.subr.bf16.mxu0 0
    %1617 = vmatpush1.bf16.msra.mxu0 %v343
    %1618 = vmatprep.subr.bf16.mxu0 0
    %1619 = vmatpush1.bf16.msra.mxu0 0
    %1620 = vmatprep.subr.bf16.mxu0 0
    %1621 = vmatpush1.bf16.msra.mxu0 0
    %1622 = vmatprep.subr.bf16.mxu0 0
    %1623 = vmatpush1.bf16.msra.mxu0 0
    %1624 = vmatprep.subr.bf16.mxu0 0
    %1625 = vmatpush1.bf16.msra.mxu0 0
    %1626 = vmatprep.subr.bf16.mxu0 0
    %1627 = vmatpush1.bf16.msra.mxu0 0
    %1628 = vmatprep.subr.bf16.mxu0 0
    %1629 = vmatpush1.bf16.msra.mxu0 0
    %1630 = vmatprep.subr.bf16.mxu0 0
    %1631 = vmatpush1.bf16.msra.mxu0 0
    %1632 = vmatprep.subr.bf16.mxu0 0
    %1633 = vmatpush1.bf16.msra.mxu0 0
    %1634 = vmatprep.subr.bf16.mxu0 0
    %1635 = vmatpush1.bf16.msra.mxu0 0
    %1636 = vmatprep.subr.bf16.mxu0 0
    %1637 = vmatpush1.bf16.msra.mxu0 0
    %1638 = vmatprep.subr.bf16.mxu0 0
    %1639 = vmatpush1.bf16.msra.mxu0 0
    %1640 = vmatprep.subr.bf16.mxu0 0
    %1641 = vmatpush1.bf16.msra.mxu0 0
    %1642 = vmatprep.subr.bf16.mxu0 0
    %1643 = vmatpush1.bf16.msra.mxu0 0
    %1644 = vmatprep.subr.bf16.mxu0 0
    %1645 = vmatpush1.bf16.msra.mxu0 0
    %1646 = vmatprep.subr.bf16.mxu0 0
    %1647 = vmatpush1.bf16.msra.mxu0 0
    %1648 = vmatprep.mubr.bf16.mxu0 0
    %1649 = vmatmul.mubr.bf16.gmra.mrb[0].mxu0 %v1614
    %v1650 = vpop.f32.mrb[0].mxu0
    %v1651 = vadd.f32 0.0, %v1650
    %v1652 = vpop.f32.mrb[0].mxu0
    %v1653 = vpop.f32.mrb[0].mxu0
    %v1654 = vadd.f32 0.0, %v1653
    %v1655 = vpop.f32.mrb[0].mxu0
    %1656 = vdwg.mxu0
    %v1657 = vsub.f32 %v1561, %v1606
    %v1658 = vsub.f32 %v1564, %v1609
    %v1659 = vadd.f32 %v1561, %v1651
    %v1660 = vadd.f32 %v1564, %v1654
    %v1661 = vmul.f32 %v1657, %v1657
    %v1662 = vmul.f32 %v1658, %v1658
    %v1663 = vmul.f32 %v1659, %v1659
    %v1664 = vmul.f32 %v1660, %v1660
    %v1665 = vadd.f32 %v1661, %v1663
    %v1666 = vadd.f32 %v1662, %v1664
    %v1667 = vrsqrt.pop %v1665
    %v1668 = vmul.f32 %v1665, %v1667
    %vm1669 = vcmp.eq.f32.partialorder %v1665, inf
    %v1670 = vsel %vm1669, %v1665, %v1668
    %vm1671 = vcmp.eq.f32.partialorder %v1665, 0.0
    %v1672 = vand.u32 %v1665, 2147483648
    %v1673 = vsel %vm1671, %v1672, %v1670
    %v1674 = vrsqrt.pop %v1666
    %v1675 = vmul.f32 %v1666, %v1674
    %vm1676 = vcmp.eq.f32.partialorder %v1666, inf
    %v1677 = vsel %vm1676, %v1666, %v1675
    %vm1678 = vcmp.eq.f32.partialorder %v1666, 0.0
    %v1679 = vand.u32 %v1666, 2147483648
    %v1680 = vsel %vm1678, %v1679, %v1677
    %v1681 = vadd.f32 %v1427, %v1673
    %v1682 = vadd.f32 %v1428, %v1680
    %s1683 = scalar_lea.vmem [#allocation11], 96
    %v1684 = vld [vmem:[%s1683] sm:$0xff]
    %v1685 = vld [vmem:[%s1683 + $0x8] sm:$0xff]
    %s1686 = scalar_lea.vmem [#allocation12], 96
    %v1687 = vld [vmem:[%s1686] sm:$0xff]
    %v1688 = vld [vmem:[%s1686 + $0x8] sm:$0xff]
    %v1689 = vsub.f32 %v1684, %v1687
    %v1690 = vsub.f32 %v1685, %v1688
    %v1691 = vpack.c.bf16 %v1690, %v1689
    %1692 = vmatprep.subr.bf16.mxu0 0
    %1693 = vmatpush1.bf16.msra.mxu0 %v1691
    %1694 = vmatprep.subr.bf16.mxu0 0
    %1695 = vmatpush1.bf16.msra.mxu0 0
    %1696 = vmatprep.subr.bf16.mxu0 0
    %1697 = vmatpush1.bf16.msra.mxu0 0
    %1698 = vmatprep.subr.bf16.mxu0 0
    %1699 = vmatpush1.bf16.msra.mxu0 0
    %1700 = vmatprep.subr.bf16.mxu0 0
    %1701 = vmatpush1.bf16.msra.mxu0 0
    %1702 = vmatprep.subr.bf16.mxu0 0
    %1703 = vmatpush1.bf16.msra.mxu0 0
    %1704 = vmatprep.subr.bf16.mxu0 0
    %1705 = vmatpush1.bf16.msra.mxu0 0
    %1706 = vmatprep.subr.bf16.mxu0 0
    %1707 = vmatpush1.bf16.msra.mxu0 0
    %1708 = vmatprep.subr.bf16.mxu0 0
    %1709 = vmatpush1.bf16.msra.mxu0 0
    %1710 = vmatprep.subr.bf16.mxu0 0
    %1711 = vmatpush1.bf16.msra.mxu0 0
    %1712 = vmatprep.subr.bf16.mxu0 0
    %1713 = vmatpush1.bf16.msra.mxu0 0
    %1714 = vmatprep.subr.bf16.mxu0 0
    %1715 = vmatpush1.bf16.msra.mxu0 0
    %1716 = vmatprep.subr.bf16.mxu0 0
    %1717 = vmatpush1.bf16.msra.mxu0 0
    %1718 = vmatprep.subr.bf16.mxu0 0
    %1719 = vmatpush1.bf16.msra.mxu0 0
    %1720 = vmatprep.subr.bf16.mxu0 0
    %1721 = vmatpush1.bf16.msra.mxu0 0
    %1722 = vmatprep.subr.bf16.mxu0 0
    %1723 = vmatpush1.bf16.msra.mxu0 0
    %1724 = vmatprep.mubr.bf16.mxu0 0
    %1725 = vmatmul.mubr.bf16.gmra.mrb[0].mxu0 %v142
    %v1726 = vpop.f32.mrb[0].mxu0
    %v1727 = vadd.f32 0.0, %v1726
    %v1728 = vpop.f32.mrb[0].mxu0
    %v1729 = vpop.f32.mrb[0].mxu0
    %v1730 = vadd.f32 0.0, %v1729
    %v1731 = vpop.f32.mrb[0].mxu0
    %1732 = vdwg.mxu0
    %1733 = vmatprep.subr.bf16.mxu0 0
    %1734 = vmatpush1.bf16.msra.mxu0 %v1691
    %1735 = vmatprep.subr.bf16.mxu0 0
    %1736 = vmatpush1.bf16.msra.mxu0 0
    %1737 = vmatprep.subr.bf16.mxu0 0
    %1738 = vmatpush1.bf16.msra.mxu0 0
    %1739 = vmatprep.subr.bf16.mxu0 0
    %1740 = vmatpush1.bf16.msra.mxu0 0
    %1741 = vmatprep.subr.bf16.mxu0 0
    %1742 = vmatpush1.bf16.msra.mxu0 0
    %1743 = vmatprep.subr.bf16.mxu0 0
    %1744 = vmatpush1.bf16.msra.mxu0 0
    %1745 = vmatprep.subr.bf16.mxu0 0
    %1746 = vmatpush1.bf16.msra.mxu0 0
    %1747 = vmatprep.subr.bf16.mxu0 0
    %1748 = vmatpush1.bf16.msra.mxu0 0
    %1749 = vmatprep.subr.bf16.mxu0 0
    %1750 = vmatpush1.bf16.msra.mxu0 0
    %1751 = vmatprep.subr.bf16.mxu0 0
    %1752 = vmatpush1.bf16.msra.mxu0 0
    %1753 = vmatprep.subr.bf16.mxu0 0
    %1754 = vmatpush1.bf16.msra.mxu0 0
    %1755 = vmatprep.subr.bf16.mxu0 0
    %1756 = vmatpush1.bf16.msra.mxu0 0
    %1757 = vmatprep.subr.bf16.mxu0 0
    %1758 = vmatpush1.bf16.msra.mxu0 0
    %1759 = vmatprep.subr.bf16.mxu0 0
    %1760 = vmatpush1.bf16.msra.mxu0 0
    %1761 = vmatprep.subr.bf16.mxu0 0
    %1762 = vmatpush1.bf16.msra.mxu0 0
    %1763 = vmatprep.subr.bf16.mxu0 0
    %1764 = vmatpush1.bf16.msra.mxu0 0
    %1765 = vmatprep.mubr.bf16.mxu0 0
    %1766 = vmatmul.mubr.bf16.gmra.mrb[0].mxu0 %v191
    %v1767 = vpop.f32.mrb[0].mxu0
    %v1768 = vadd.f32 0.0, %v1767
    %v1769 = vpop.f32.mrb[0].mxu0
    %v1770 = vpop.f32.mrb[0].mxu0
    %v1771 = vadd.f32 0.0, %v1770
    %v1772 = vpop.f32.mrb[0].mxu0
    %1773 = vdwg.mxu0
    %v1774 = vadd.f32 %v1727, %v1768
    %v1775 = vadd.f32 %v1730, %v1771
    %v1776 = vpack.c.bf16 %v1775, %v1774
    %v1778 = vsel %vm140, %v1776, 0
    %1780 = vmatprep.subr.bf16.mxu0 0
    %1781 = vmatpush1.bf16.msra.mxu0 %v241
    %1782 = vmatprep.subr.bf16.mxu0 0
    %1783 = vmatpush1.bf16.msra.mxu0 0
    %1784 = vmatprep.subr.bf16.mxu0 0
    %1785 = vmatpush1.bf16.msra.mxu0 0
    %1786 = vmatprep.subr.bf16.mxu0 0
    %1787 = vmatpush1.bf16.msra.mxu0 0
    %1788 = vmatprep.subr.bf16.mxu0 0
    %1789 = vmatpush1.bf16.msra.mxu0 0
    %1790 = vmatprep.subr.bf16.mxu0 0
    %1791 = vmatpush1.bf16.msra.mxu0 0
    %1792 = vmatprep.subr.bf16.mxu0 0
    %1793 = vmatpush1.bf16.msra.mxu0 0
    %1794 = vmatprep.subr.bf16.mxu0 0
    %1795 = vmatpush1.bf16.msra.mxu0 0
    %1796 = vmatprep.subr.bf16.mxu0 0
    %1797 = vmatpush1.bf16.msra.mxu0 0
    %1798 = vmatprep.subr.bf16.mxu0 0
    %1799 = vmatpush1.bf16.msra.mxu0 0
    %1800 = vmatprep.subr.bf16.mxu0 0
    %1801 = vmatpush1.bf16.msra.mxu0 0
    %1802 = vmatprep.subr.bf16.mxu0 0
    %1803 = vmatpush1.bf16.msra.mxu0 0
    %1804 = vmatprep.subr.bf16.mxu0 0
    %1805 = vmatpush1.bf16.msra.mxu0 0
    %1806 = vmatprep.subr.bf16.mxu0 0
    %1807 = vmatpush1.bf16.msra.mxu0 0
    %1808 = vmatprep.subr.bf16.mxu0 0
    %1809 = vmatpush1.bf16.msra.mxu0 0
    %1810 = vmatprep.subr.bf16.mxu0 0
    %1811 = vmatpush1.bf16.msra.mxu0 0
    %1812 = vmatprep.mubr.bf16.mxu0 0
    %1813 = vmatmul.mubr.bf16.gmra.mrb[0].mxu0 %v1778
    %v1814 = vpop.f32.mrb[0].mxu0
    %v1815 = vadd.f32 0.0, %v1814
    %v1816 = vpop.f32.mrb[0].mxu0
    %v1817 = vpop.f32.mrb[0].mxu0
    %v1818 = vadd.f32 0.0, %v1817
    %v1819 = vpop.f32.mrb[0].mxu0
    %1820 = vdwg.mxu0
    %v1821 = vpack.c.bf16 %v1771, %v1768
    %v1823 = vsel %vm140, %v1821, 0
    %1825 = vmatprep.subr.bf16.mxu0 0
    %1826 = vmatpush1.bf16.msra.mxu0 %v292
    %1827 = vmatprep.subr.bf16.mxu0 0
    %1828 = vmatpush1.bf16.msra.mxu0 0
    %1829 = vmatprep.subr.bf16.mxu0 0
    %1830 = vmatpush1.bf16.msra.mxu0 0
    %1831 = vmatprep.subr.bf16.mxu0 0
    %1832 = vmatpush1.bf16.msra.mxu0 0
    %1833 = vmatprep.subr.bf16.mxu0 0
    %1834 = vmatpush1.bf16.msra.mxu0 0
    %1835 = vmatprep.subr.bf16.mxu0 0
    %1836 = vmatpush1.bf16.msra.mxu0 0
    %1837 = vmatprep.subr.bf16.mxu0 0
    %1838 = vmatpush1.bf16.msra.mxu0 0
    %1839 = vmatprep.subr.bf16.mxu0 0
    %1840 = vmatpush1.bf16.msra.mxu0 0
    %1841 = vmatprep.subr.bf16.mxu0 0
    %1842 = vmatpush1.bf16.msra.mxu0 0
    %1843 = vmatprep.subr.bf16.mxu0 0
    %1844 = vmatpush1.bf16.msra.mxu0 0
    %1845 = vmatprep.subr.bf16.mxu0 0
    %1846 = vmatpush1.bf16.msra.mxu0 0
    %1847 = vmatprep.subr.bf16.mxu0 0
    %1848 = vmatpush1.bf16.msra.mxu0 0
    %1849 = vmatprep.subr.bf16.mxu0 0
    %1850 = vmatpush1.bf16.msra.mxu0 0
    %1851 = vmatprep.subr.bf16.mxu0 0
    %1852 = vmatpush1.bf16.msra.mxu0 0
    %1853 = vmatprep.subr.bf16.mxu0 0
    %1854 = vmatpush1.bf16.msra.mxu0 0
    %1855 = vmatprep.subr.bf16.mxu0 0
    %1856 = vmatpush1.bf16.msra.mxu0 0
    %1857 = vmatprep.mubr.bf16.mxu0 0
    %1858 = vmatmul.mubr.bf16.gmra.mrb[0].mxu0 %v1823
    %v1859 = vpop.f32.mrb[0].mxu0
    %v1860 = vadd.f32 0.0, %v1859
    %v1861 = vpop.f32.mrb[0].mxu0
    %v1862 = vpop.f32.mrb[0].mxu0
    %v1863 = vadd.f32 0.0, %v1862
    %v1864 = vpop.f32.mrb[0].mxu0
    %1865 = vdwg.mxu0
    %v1866 = vpack.c.bf16 %v1730, %v1727
    %v1868 = vsel %vm140, %v1866, 0
    %1870 = vmatprep.subr.bf16.mxu0 0
    %1871 = vmatpush1.bf16.msra.mxu0 %v343
    %1872 = vmatprep.subr.bf16.mxu0 0
    %1873 = vmatpush1.bf16.msra.mxu0 0
    %1874 = vmatprep.subr.bf16.mxu0 0
    %1875 = vmatpush1.bf16.msra.mxu0 0
    %1876 = vmatprep.subr.bf16.mxu0 0
    %1877 = vmatpush1.bf16.msra.mxu0 0
    %1878 = vmatprep.subr.bf16.mxu0 0
    %1879 = vmatpush1.bf16.msra.mxu0 0
    %1880 = vmatprep.subr.bf16.mxu0 0
    %1881 = vmatpush1.bf16.msra.mxu0 0
    %1882 = vmatprep.subr.bf16.mxu0 0
    %1883 = vmatpush1.bf16.msra.mxu0 0
    %1884 = vmatprep.subr.bf16.mxu0 0
    %1885 = vmatpush1.bf16.msra.mxu0 0
    %1886 = vmatprep.subr.bf16.mxu0 0
    %1887 = vmatpush1.bf16.msra.mxu0 0
    %1888 = vmatprep.subr.bf16.mxu0 0
    %1889 = vmatpush1.bf16.msra.mxu0 0
    %1890 = vmatprep.subr.bf16.mxu0 0
    %1891 = vmatpush1.bf16.msra.mxu0 0
    %1892 = vmatprep.subr.bf16.mxu0 0
    %1893 = vmatpush1.bf16.msra.mxu0 0
    %1894 = vmatprep.subr.bf16.mxu0 0
    %1895 = vmatpush1.bf16.msra.mxu0 0
    %1896 = vmatprep.subr.bf16.mxu0 0
    %1897 = vmatpush1.bf16.msra.mxu0 0
    %1898 = vmatprep.subr.bf16.mxu0 0
    %1899 = vmatpush1.bf16.msra.mxu0 0
    %1900 = vmatprep.subr.bf16.mxu0 0
    %1901 = vmatpush1.bf16.msra.mxu0 0
    %1902 = vmatprep.mubr.bf16.mxu0 0
    %1903 = vmatmul.mubr.bf16.gmra.mrb[0].mxu0 %v1868
    %v1904 = vpop.f32.mrb[0].mxu0
    %v1905 = vadd.f32 0.0, %v1904
    %v1906 = vpop.f32.mrb[0].mxu0
    %v1907 = vpop.f32.mrb[0].mxu0
    %v1908 = vadd.f32 0.0, %v1907
    %v1909 = vpop.f32.mrb[0].mxu0
    %1910 = vdwg.mxu0
    %v1911 = vsub.f32 %v1815, %v1860
    %v1912 = vsub.f32 %v1818, %v1863
    %v1913 = vadd.f32 %v1815, %v1905
    %v1914 = vadd.f32 %v1818, %v1908
    %v1915 = vmul.f32 %v1911, %v1911
    %v1916 = vmul.f32 %v1912, %v1912
    %v1917 = vmul.f32 %v1913, %v1913
    %v1918 = vmul.f32 %v1914, %v1914
    %v1919 = vadd.f32 %v1915, %v1917
    %v1920 = vadd.f32 %v1916, %v1918
    %v1921 = vrsqrt.pop %v1919
    %v1922 = vmul.f32 %v1919, %v1921
    %vm1923 = vcmp.eq.f32.partialorder %v1919, inf
    %v1924 = vsel %vm1923, %v1919, %v1922
    %vm1925 = vcmp.eq.f32.partialorder %v1919, 0.0
    %v1926 = vand.u32 %v1919, 2147483648
    %v1927 = vsel %vm1925, %v1926, %v1924
    %v1928 = vrsqrt.pop %v1920
    %v1929 = vmul.f32 %v1920, %v1928
    %vm1930 = vcmp.eq.f32.partialorder %v1920, inf
    %v1931 = vsel %vm1930, %v1920, %v1929
    %vm1932 = vcmp.eq.f32.partialorder %v1920, 0.0
    %v1933 = vand.u32 %v1920, 2147483648
    %v1934 = vsel %vm1932, %v1933, %v1931
    %v1935 = vadd.f32 %v1681, %v1927
    %v1936 = vadd.f32 %v1682, %v1934
    %s1937 = scalar_lea.vmem [#allocation11], 112
    %v1938 = vld [vmem:[%s1937] sm:$0xff]
    %v1939 = vld [vmem:[%s1937 + $0x8] sm:$0xff]
    %s1940 = scalar_lea.vmem [#allocation12], 112
    %v1941 = vld [vmem:[%s1940] sm:$0xff]
    %v1942 = vld [vmem:[%s1940 + $0x8] sm:$0xff]
    %v1943 = vsub.f32 %v1938, %v1941
    %v1944 = vsub.f32 %v1939, %v1942
    %v1945 = vpack.c.bf16 %v1944, %v1943
    %1946 = vmatprep.subr.bf16.mxu0 0
    %1947 = vmatpush1.bf16.msra.mxu0 %v1945
    %1948 = vmatprep.subr.bf16.mxu0 0
    %1949 = vmatpush1.bf16.msra.mxu0 0
    %1950 = vmatprep.subr.bf16.mxu0 0
    %1951 = vmatpush1.bf16.msra.mxu0 0
    %1952 = vmatprep.subr.bf16.mxu0 0
    %1953 = vmatpush1.bf16.msra.mxu0 0
    %1954 = vmatprep.subr.bf16.mxu0 0
    %1955 = vmatpush1.bf16.msra.mxu0 0
    %1956 = vmatprep.subr.bf16.mxu0 0
    %1957 = vmatpush1.bf16.msra.mxu0 0
    %1958 = vmatprep.subr.bf16.mxu0 0
    %1959 = vmatpush1.bf16.msra.mxu0 0
    %1960 = vmatprep.subr.bf16.mxu0 0
    %1961 = vmatpush1.bf16.msra.mxu0 0
    %1962 = vmatprep.subr.bf16.mxu0 0
    %1963 = vmatpush1.bf16.msra.mxu0 0
    %1964 = vmatprep.subr.bf16.mxu0 0
    %1965 = vmatpush1.bf16.msra.mxu0 0
    %1966 = vmatprep.subr.bf16.mxu0 0
    %1967 = vmatpush1.bf16.msra.mxu0 0
    %1968 = vmatprep.subr.bf16.mxu0 0
    %1969 = vmatpush1.bf16.msra.mxu0 0
    %1970 = vmatprep.subr.bf16.mxu0 0
    %1971 = vmatpush1.bf16.msra.mxu0 0
    %1972 = vmatprep.subr.bf16.mxu0 0
    %1973 = vmatpush1.bf16.msra.mxu0 0
    %1974 = vmatprep.subr.bf16.mxu0 0
    %1975 = vmatpush1.bf16.msra.mxu0 0
    %1976 = vmatprep.subr.bf16.mxu0 0
    %1977 = vmatpush1.bf16.msra.mxu0 0
    %1978 = vmatprep.mubr.bf16.mxu0 0
    %1979 = vmatmul.mubr.bf16.gmra.mrb[0].mxu0 %v142
    %v1980 = vpop.f32.mrb[0].mxu0
    %v1981 = vadd.f32 0.0, %v1980
    %v1982 = vpop.f32.mrb[0].mxu0
    %v1983 = vpop.f32.mrb[0].mxu0
    %v1984 = vadd.f32 0.0, %v1983
    %v1985 = vpop.f32.mrb[0].mxu0
    %1986 = vdwg.mxu0
    %1987 = vmatprep.subr.bf16.mxu0 0
    %1988 = vmatpush1.bf16.msra.mxu0 %v1945
    %1989 = vmatprep.subr.bf16.mxu0 0
    %1990 = vmatpush1.bf16.msra.mxu0 0
    %1991 = vmatprep.subr.bf16.mxu0 0
    %1992 = vmatpush1.bf16.msra.mxu0 0
    %1993 = vmatprep.subr.bf16.mxu0 0
    %1994 = vmatpush1.bf16.msra.mxu0 0
    %1995 = vmatprep.subr.bf16.mxu0 0
    %1996 = vmatpush1.bf16.msra.mxu0 0
    %1997 = vmatprep.subr.bf16.mxu0 0
    %1998 = vmatpush1.bf16.msra.mxu0 0
    %1999 = vmatprep.subr.bf16.mxu0 0
    %2000 = vmatpush1.bf16.msra.mxu0 0
    %2001 = vmatprep.subr.bf16.mxu0 0
    %2002 = vmatpush1.bf16.msra.mxu0 0
    %2003 = vmatprep.subr.bf16.mxu0 0
    %2004 = vmatpush1.bf16.msra.mxu0 0
    %2005 = vmatprep.subr.bf16.mxu0 0
    %2006 = vmatpush1.bf16.msra.mxu0 0
    %2007 = vmatprep.subr.bf16.mxu0 0
    %2008 = vmatpush1.bf16.msra.mxu0 0
    %2009 = vmatprep.subr.bf16.mxu0 0
    %2010 = vmatpush1.bf16.msra.mxu0 0
    %2011 = vmatprep.subr.bf16.mxu0 0
    %2012 = vmatpush1.bf16.msra.mxu0 0
    %2013 = vmatprep.subr.bf16.mxu0 0
    %2014 = vmatpush1.bf16.msra.mxu0 0
    %2015 = vmatprep.subr.bf16.mxu0 0
    %2016 = vmatpush1.bf16.msra.mxu0 0
    %2017 = vmatprep.subr.bf16.mxu0 0
    %2018 = vmatpush1.bf16.msra.mxu0 0
    %2019 = vmatprep.mubr.bf16.mxu0 0
    %2020 = vmatmul.mubr.bf16.gmra.mrb[0].mxu0 %v191
    %v2021 = vpop.f32.mrb[0].mxu0
    %v2022 = vadd.f32 0.0, %v2021
    %v2023 = vpop.f32.mrb[0].mxu0
    %v2024 = vpop.f32.mrb[0].mxu0
    %v2025 = vadd.f32 0.0, %v2024
    %v2026 = vpop.f32.mrb[0].mxu0
    %2027 = vdwg.mxu0
    %v2028 = vadd.f32 %v1981, %v2022
    %v2029 = vadd.f32 %v1984, %v2025
    %v2030 = vpack.c.bf16 %v2029, %v2028
    %v2032 = vsel %vm140, %v2030, 0
    %2034 = vmatprep.subr.bf16.mxu0 0
    %2035 = vmatpush1.bf16.msra.mxu0 %v241
    %2036 = vmatprep.subr.bf16.mxu0 0
    %2037 = vmatpush1.bf16.msra.mxu0 0
    %2038 = vmatprep.subr.bf16.mxu0 0
    %2039 = vmatpush1.bf16.msra.mxu0 0
    %2040 = vmatprep.subr.bf16.mxu0 0
    %2041 = vmatpush1.bf16.msra.mxu0 0
    %2042 = vmatprep.subr.bf16.mxu0 0
    %2043 = vmatpush1.bf16.msra.mxu0 0
    %2044 = vmatprep.subr.bf16.mxu0 0
    %2045 = vmatpush1.bf16.msra.mxu0 0
    %2046 = vmatprep.subr.bf16.mxu0 0
    %2047 = vmatpush1.bf16.msra.mxu0 0
    %2048 = vmatprep.subr.bf16.mxu0 0
    %2049 = vmatpush1.bf16.msra.mxu0 0
    %2050 = vmatprep.subr.bf16.mxu0 0
    %2051 = vmatpush1.bf16.msra.mxu0 0
    %2052 = vmatprep.subr.bf16.mxu0 0
    %2053 = vmatpush1.bf16.msra.mxu0 0
    %2054 = vmatprep.subr.bf16.mxu0 0
    %2055 = vmatpush1.bf16.msra.mxu0 0
    %2056 = vmatprep.subr.bf16.mxu0 0
    %2057 = vmatpush1.bf16.msra.mxu0 0
    %2058 = vmatprep.subr.bf16.mxu0 0
    %2059 = vmatpush1.bf16.msra.mxu0 0
    %2060 = vmatprep.subr.bf16.mxu0 0
    %2061 = vmatpush1.bf16.msra.mxu0 0
    %2062 = vmatprep.subr.bf16.mxu0 0
    %2063 = vmatpush1.bf16.msra.mxu0 0
    %2064 = vmatprep.subr.bf16.mxu0 0
    %2065 = vmatpush1.bf16.msra.mxu0 0
    %2066 = vmatprep.mubr.bf16.mxu0 0
    %2067 = vmatmul.mubr.bf16.gmra.mrb[0].mxu0 %v2032
    %v2068 = vpop.f32.mrb[0].mxu0
    %v2069 = vadd.f32 0.0, %v2068
    %v2070 = vpop.f32.mrb[0].mxu0
    %v2071 = vpop.f32.mrb[0].mxu0
    %v2072 = vadd.f32 0.0, %v2071
    %v2073 = vpop.f32.mrb[0].mxu0
    %2074 = vdwg.mxu0
    %v2075 = vpack.c.bf16 %v2025, %v2022
    %v2077 = vsel %vm140, %v2075, 0
    %2079 = vmatprep.subr.bf16.mxu0 0
    %2080 = vmatpush1.bf16.msra.mxu0 %v292
    %2081 = vmatprep.subr.bf16.mxu0 0
    %2082 = vmatpush1.bf16.msra.mxu0 0
    %2083 = vmatprep.subr.bf16.mxu0 0
    %2084 = vmatpush1.bf16.msra.mxu0 0
    %2085 = vmatprep.subr.bf16.mxu0 0
    %2086 = vmatpush1.bf16.msra.mxu0 0
    %2087 = vmatprep.subr.bf16.mxu0 0
    %2088 = vmatpush1.bf16.msra.mxu0 0
    %2089 = vmatprep.subr.bf16.mxu0 0
    %2090 = vmatpush1.bf16.msra.mxu0 0
    %2091 = vmatprep.subr.bf16.mxu0 0
    %2092 = vmatpush1.bf16.msra.mxu0 0
    %2093 = vmatprep.subr.bf16.mxu0 0
    %2094 = vmatpush1.bf16.msra.mxu0 0
    %2095 = vmatprep.subr.bf16.mxu0 0
    %2096 = vmatpush1.bf16.msra.mxu0 0
    %2097 = vmatprep.subr.bf16.mxu0 0
    %2098 = vmatpush1.bf16.msra.mxu0 0
    %2099 = vmatprep.subr.bf16.mxu0 0
    %2100 = vmatpush1.bf16.msra.mxu0 0
    %2101 = vmatprep.subr.bf16.mxu0 0
    %2102 = vmatpush1.bf16.msra.mxu0 0
    %2103 = vmatprep.subr.bf16.mxu0 0
    %2104 = vmatpush1.bf16.msra.mxu0 0
    %2105 = vmatprep.subr.bf16.mxu0 0
    %2106 = vmatpush1.bf16.msra.mxu0 0
    %2107 = vmatprep.subr.bf16.mxu0 0
    %2108 = vmatpush1.bf16.msra.mxu0 0
    %2109 = vmatprep.subr.bf16.mxu0 0
    %2110 = vmatpush1.bf16.msra.mxu0 0
    %2111 = vmatprep.mubr.bf16.mxu0 0
    %2112 = vmatmul.mubr.bf16.gmra.mrb[0].mxu0 %v2077
    %v2113 = vpop.f32.mrb[0].mxu0
    %v2114 = vadd.f32 0.0, %v2113
    %v2115 = vpop.f32.mrb[0].mxu0
    %v2116 = vpop.f32.mrb[0].mxu0
    %v2117 = vadd.f32 0.0, %v2116
    %v2118 = vpop.f32.mrb[0].mxu0
    %2119 = vdwg.mxu0
    %v2120 = vpack.c.bf16 %v1984, %v1981
    %v2122 = vsel %vm140, %v2120, 0
    %2124 = vmatprep.subr.bf16.mxu0 0
    %2125 = vmatpush1.bf16.msra.mxu0 %v343
    %2126 = vmatprep.subr.bf16.mxu0 0
    %2127 = vmatpush1.bf16.msra.mxu0 0
    %2128 = vmatprep.subr.bf16.mxu0 0
    %2129 = vmatpush1.bf16.msra.mxu0 0
    %2130 = vmatprep.subr.bf16.mxu0 0
    %2131 = vmatpush1.bf16.msra.mxu0 0
    %2132 = vmatprep.subr.bf16.mxu0 0
    %2133 = vmatpush1.bf16.msra.mxu0 0
    %2134 = vmatprep.subr.bf16.mxu0 0
    %2135 = vmatpush1.bf16.msra.mxu0 0
    %2136 = vmatprep.subr.bf16.mxu0 0
    %2137 = vmatpush1.bf16.msra.mxu0 0
    %2138 = vmatprep.subr.bf16.mxu0 0
    %2139 = vmatpush1.bf16.msra.mxu0 0
    %2140 = vmatprep.subr.bf16.mxu0 0
    %2141 = vmatpush1.bf16.msra.mxu0 0
    %2142 = vmatprep.subr.bf16.mxu0 0
    %2143 = vmatpush1.bf16.msra.mxu0 0
    %2144 = vmatprep.subr.bf16.mxu0 0
    %2145 = vmatpush1.bf16.msra.mxu0 0
    %2146 = vmatprep.subr.bf16.mxu0 0
    %2147 = vmatpush1.bf16.msra.mxu0 0
    %2148 = vmatprep.subr.bf16.mxu0 0
    %2149 = vmatpush1.bf16.msra.mxu0 0
    %2150 = vmatprep.subr.bf16.mxu0 0
    %2151 = vmatpush1.bf16.msra.mxu0 0
    %2152 = vmatprep.subr.bf16.mxu0 0
    %2153 = vmatpush1.bf16.msra.mxu0 0
    %2154 = vmatprep.subr.bf16.mxu0 0
    %2155 = vmatpush1.bf16.msra.mxu0 0
    %2156 = vmatprep.mubr.bf16.mxu0 0
    %2157 = vmatmul.mubr.bf16.gmra.mrb[0].mxu0 %v2122
    %v2158 = vpop.f32.mrb[0].mxu0
    %v2159 = vadd.f32 0.0, %v2158
    %v2160 = vpop.f32.mrb[0].mxu0
    %v2161 = vpop.f32.mrb[0].mxu0
    %v2162 = vadd.f32 0.0, %v2161
    %v2163 = vpop.f32.mrb[0].mxu0
    %2164 = vdwg.mxu0
    %v2165 = vsub.f32 %v2069, %v2114
    %v2166 = vsub.f32 %v2072, %v2117
    %v2167 = vadd.f32 %v2069, %v2159
    %v2168 = vadd.f32 %v2072, %v2162
    %v2169 = vmul.f32 %v2165, %v2165
    %v2170 = vmul.f32 %v2166, %v2166
    %v2171 = vmul.f32 %v2167, %v2167
    %v2172 = vmul.f32 %v2168, %v2168
    %v2173 = vadd.f32 %v2169, %v2171
    %v2174 = vadd.f32 %v2170, %v2172
    %v2175 = vrsqrt.pop %v2173
    %v2176 = vmul.f32 %v2173, %v2175
    %vm2177 = vcmp.eq.f32.partialorder %v2173, inf
    %v2178 = vsel %vm2177, %v2173, %v2176
    %vm2179 = vcmp.eq.f32.partialorder %v2173, 0.0
    %v2180 = vand.u32 %v2173, 2147483648
    %v2181 = vsel %vm2179, %v2180, %v2178
    %v2182 = vrsqrt.pop %v2174
    %v2183 = vmul.f32 %v2174, %v2182
    %vm2184 = vcmp.eq.f32.partialorder %v2174, inf
    %v2185 = vsel %vm2184, %v2174, %v2183
    %vm2186 = vcmp.eq.f32.partialorder %v2174, 0.0
    %v2187 = vand.u32 %v2174, 2147483648
    %v2188 = vsel %vm2186, %v2187, %v2185
    %v2189 = vadd.f32 %v1935, %v2181
    %v2190 = vadd.f32 %v1936, %v2188
    %v2191 = vld [vmem:[#allocation2] sm:$0xff]
    %v2192 = vld [vmem:[#allocation2 + $0x8] sm:$0x1]
    %v2193 = vadd.f32 %v2191, %v2189
    %v2194 = vadd.f32 %v2192, %v2190
    %2195 = vst.msk [vmem:[#allocation2] sm:$0xff] %vm140, %v2193
    %vm2196 = vcmask 122880
    %2197 = vst.msk [vmem:[#allocation2 + $0x8] sm:$0x1] %vm2196, %v2194
    // Predicated region
    $region58: #{tpu_custom_call.1} parent=1 // pred_check
      %p2198 = pneg %p110
    $region59: #{tpu_custom_call.1} parent=1 // pred_check_branch
      %2200 = sbr.rel (%p2198) target = $region61
    $region60: #{tpu_custom_call.1} parent=1 // pred_region
      %v2201 = vld [vmem:[#allocation2] sm:$0xff]
      %v2202 = vld [vmem:[#allocation2 + $0x8] sm:$0x1]
      %v2203 = vsel %vm140, %v2201, 0.0
      %v2204 = vsel %vm2196, %v2202, 0.0
      %v2205 = vadd.f32 %v2203, %v2204
      %2206 = vadd.xlane.f32.xlu0 %v2205
      %v2207 = vpop.xlane.xlu0 %2206
      %v2208 = vrot.slane %v2207, 4
      %v2209 = vadd.f32 %v2207, %v2208
      %v2210 = vrot.slane %v2209, 2
      %v2211 = vadd.f32 %v2209, %v2210
      %v2212 = vrot.slane %v2211, 1
      %v2213 = vadd.f32 %v2211, %v2212
      %s2214 = vtos %v2213
      %v2215 = vstv %s2214
      %v2216 = vadd.f32 %v2215, 0.0
      %vm2217 = vcmask 0
      %2218 = vst.msk [vmem:[#allocation14] sm:$0x1] %vm2217, %v2216
    $region61: #{tpu_custom_call.1} parent=1 // pred_fallthru
      _
    // Predicated region
    $region62: #{tpu_custom_call.1} parent=1 // pred_check
      _
    $region63: #{tpu_custom_call.1} parent=1 // pred_check_branch
      %2220 = sbr.rel (0) target = $region65
    $region64: #{tpu_custom_call.1} parent=1 // pred_region
      %s2222 = ssub.s32 16, 16
      %2223 = vsyncadd [#allocation5], %s2222
      %s2225 = sshll.u32 [#allocation14], 4
      %s2226 = int_to_ptr.vmem [resolvable:$true] %s2225
      %2228 = dma.vmem_to_hbm [thread:$0]  %s2226, 16, %s7, [#allocation5]
    $region65: #{tpu_custom_call.1} parent=1 // pred_fallthru
      _
    // Predicated region
    $region66: #{tpu_custom_call.1} parent=1 // pred_check
      _
    $region67: #{tpu_custom_call.1} parent=1 // pred_check_branch
      %2230 = sbr.rel (0) target = $region69
    $region68: #{tpu_custom_call.1} parent=1 // pred_region
      %2231 = dma.done [#allocation5], 16
    $region69: #{tpu_custom_call.1} parent=1 // pred_fallthru
      _
    %2232 = vsyncpa [#allocation4], 1
    %2233 = vsyncpa [#allocation7], 1
    %2234 = vsyncpa [#allocation10], 1
    %2235 = vsyncpa [#allocation13], 1
    %2236 = vsyncpa [#allocation5], 1

</llo_original>
